<compile_context>
chip_gen: v6e
topology: v6e:2x2x1
jax: 0.10.0
libtpu: 0.0.40
codegen_flags: <defaults>
</compile_context>

<pallas_src>
import math

import jax
import jax.numpy as jnp
from jax import lax
from jax.experimental import pallas as pl
from jax.experimental.pallas import tpu as pltpu

_SUBLANE = 8
_LANE = 128


def _round_up(x, m):
    return ((x + m - 1) // m) * m


def _packed_sublanes(dtype):
    """Rows of this dtype per packed vreg sublane group (8 f32, 16 bf16, 32 i8)."""
    itemsize = jnp.dtype(dtype).itemsize
    return _SUBLANE * max(1, 4 // itemsize)


def _vmem_capacity_bytes():
    try:
        return int(pltpu.get_tpu_info().vmem_capacity_bytes)
    except Exception:
        return 64 * 1024 * 1024          # conservative (v7x per-TC)


def _make_kernel(*, inv_t, tt, t_rem, chunk_rows):
    """Build the time-reduction kernel for static tile parameters."""
    needs_mask = t_rem != tt             # only the last time tile can overhang
    chunk = min(chunk_rows, tt)

    def kernel(x_ref, o_ref, acc_ref):
        # x_ref:   (TB, TT, TF) input tile
        # o_ref:   (TB, TF)     output tile (written once, at the last k)
        # acc_ref: (TB, TF)     f32 accumulator scratch (resident across k)
        k = pl.program_id(2)
        last = pl.num_programs(2) - 1

        @pl.when(k == 0)
        def _init():
            acc_ref[...] = jnp.zeros_like(acc_ref)

        def chunk_sum(start, carry):
            xs = x_ref[:, pl.ds(start, chunk), :].astype(jnp.float32)
            return carry + jnp.sum(xs, axis=1)

        def sum_rows(limit):
            # Sum the first `limit` (static) time rows of the tile in
            # sublane-packed chunks (bounds vreg / f32-temp pressure).
            n_full = limit // chunk
            rem = limit - n_full * chunk
            total = jnp.zeros(acc_ref.shape, jnp.float32)
            if n_full == 1:
                total = chunk_sum(0, total)
            elif n_full > 1:
                total = lax.fori_loop(
                    0, n_full,
                    lambda c, carry: chunk_sum(
                        pl.multiple_of(c * chunk, chunk), carry),
                    total,
                    unroll=True if n_full <= 16 else 8)
            if rem > 0:
                # Static partial tail slice: no runtime iota/compare/select.
                xs = x_ref[:, pl.ds(n_full * chunk, rem), :].astype(jnp.float32)
                total = total + jnp.sum(xs, axis=1)
            return total

        if not needs_mask:
            acc_ref[...] += sum_rows(tt)
        else:
            @pl.when(k < last)
            def _body():
                acc_ref[...] += sum_rows(tt)

            @pl.when(k == last)
            def _tail():
                acc_ref[...] += sum_rows(t_rem)

        @pl.when(k == last)
        def _finalize():
            o_ref[...] = (acc_ref[...] * inv_t).astype(o_ref.dtype)

    return kernel


def temporal_avg_pool(
    inputs,
    dim=1,
    *,
    min_pallas_bytes=256 * 1024,   # below this, plain jnp.mean wins
    tf_max=2048,                   # feature (lane) tile cap when F must split
    tt_max=2048,                   # time tile cap (compile-time guard)
    tile_budget_bytes=None,        # per input buffer (x2 double-buffered)
):
    """Mean over `dim` (default 1), matching torch.mean(inputs, dim=dim)."""
    dim = dim % inputs.ndim
    shape = inputs.shape
    t = shape[dim]
    b = math.prod(shape[:dim])
    f = math.prod(shape[dim + 1:])
    out_final_shape = shape[:dim] + shape[dim + 1:]

    itemsize = jnp.dtype(inputs.dtype).itemsize
    total_bytes = b * t * f * itemsize

    # Fast path: tiny inputs (launch overhead dominates) or degenerate lane dim.
    # f32 accumulation keeps precision parity with the Pallas path.
    if t == 0 or f == 1 or total_bytes < min_pallas_bytes:
        return jnp.mean(inputs, axis=dim, dtype=jnp.float32).astype(inputs.dtype)

    # Reduce-axis handling is a pure reshape (row-major contiguous), never a
    # transpose copy: (prefix, T, suffix) -> (B, T, F).
    x = inputs.reshape(b, t, f)

    sub = _packed_sublanes(inputs.dtype)
    vmem_cap = _vmem_capacity_bytes()
    if tile_budget_bytes is None:
        # Generation-aware: ~8 MiB per input buffer on v7x (64 MiB VMEM),
        # ~16 MiB on v5e/v6e (128 MiB VMEM).
        tile_budget_bytes = max(2 << 20, min(16 << 20, vmem_cap // 8))
    vmem_limit_bytes = int(max(32 << 20, min(vmem_cap - (16 << 20), 96 << 20)))

    def fits(tb_, tt_, tf_):
        return tb_ * tt_ * tf_ * itemsize <= tile_budget_bytes

    # ---- tile selection --------------------------------------------------
    # Batch tile: 8 sublane-dense output rows (or the whole batch if small).
    tb = b if b < _SUBLANE else _SUBLANE

    # Feature tile: keep the full feature width whenever one packed sublane
    # group of time rows fits the budget -> contiguous (tt, F) DMA slabs per
    # batch row and wide unmasked lane-dense output stores.
    if fits(tb, sub, f):
        tf = f
    elif f <= _LANE:
        tf = f
    else:
        tf = max(_LANE, min(tf_max, (f // _LANE) * _LANE))
        while tf > _LANE and not fits(tb, sub, tf):
            tf = _round_up(tf // 2, _LANE)

    # Time (reduction) tile: fill the remaining per-buffer budget.
    row_bytes = tb * tf * itemsize
    tt_cap = tile_budget_bytes // row_bytes
    tt_cap = max(sub, (tt_cap // sub) * sub)
    tt_cap = min(tt_cap, max(sub, (tt_max // sub) * sub))
    if t <= tt_cap:
        tt = t
    else:
        g = pl.cdiv(t, tt_cap)
        tt = _round_up(pl.cdiv(t, g), sub)       # balanced, sublane-packed

    # Batch tile growth: when one block already spans the full (T, F) plane,
    # grow TB (multiples of 8) to cut grid steps / enlarge each DMA for
    # batch-heavy, small-T*F shapes.
    if tt == t and tf == f:
        while tb * 2 <= b and fits(tb * 2, tt, tf):
            tb *= 2

    # v7x megacore: guarantee >= 2 blocks on the 'parallel' axes so both
    # TensorCores get work (one extra ~0.35us grid step on single-TC chips).
    if pl.cdiv(b, tb) * pl.cdiv(f, tf) == 1:
        if b > _SUBLANE:
            tb = _round_up(pl.cdiv(b, 2), _SUBLANE)
        elif f >= 2 * _LANE:
            tf = _round_up(pl.cdiv(f, 2), _LANE)

    grid = (pl.cdiv(b, tb), pl.cdiv(f, tf), pl.cdiv(t, tt))
    nt = grid[2]
    t_rem = t - (nt - 1) * tt                     # valid rows in the last tile

    kernel = _make_kernel(inv_t=1.0 / t, tt=tt, t_rem=t_rem, chunk_rows=sub)

    out = pl.pallas_call(
        kernel,
        out_shape=jax.ShapeDtypeStruct((b, f), inputs.dtype),
        grid_spec=pltpu.PrefetchScalarGridSpec(
            num_scalar_prefetch=0,
            grid=grid,
            in_specs=[pl.BlockSpec((tb, tt, tf), lambda i, j, k: (i, k, j))],
            out_specs=pl.BlockSpec((tb, tf), lambda i, j, k: (i, j)),
            scratch_shapes=[pltpu.VMEM((tb, tf), jnp.float32)],
        ),
        compiler_params=pltpu.CompilerParams(
            dimension_semantics=("parallel", "parallel", "arbitrary"),
            vmem_limit_bytes=vmem_limit_bytes,
        ),
        cost_estimate=pl.CostEstimate(
            flops=b * t * f + b * f,
            transcendentals=0,
            bytes_accessed=b * t * f * itemsize + b * f * itemsize,
        ),
    )(x)

    return out.reshape(out_final_shape)


if __name__ == "__main__":
    key = jax.random.PRNGKey(0)
    k1, k2, k3, k4 = jax.random.split(key, 4)

    # 1) Tiny input (module docstring scale): takes the jnp.mean fast path.
    x_small = jax.random.normal(k1, (2, 8, 4, 16), dtype=jnp.float32)
    out_small = jax.block_until_ready(temporal_avg_pool(x_small, dim=1))
    ref_small = jnp.mean(x_small, axis=1)
    assert out_small.shape == (2, 4, 16) and out_small.dtype == x_small.dtype
    assert jnp.allclose(out_small, ref_small, atol=1e-5, rtol=1e-5)

    # 2) Larger aligned input: exercises the tiled Pallas kernel with the
    #    default (VMEM-aware) tile heuristics and the >=2-parallel-block rule.
    x_big = jax.random.normal(k2, (16, 32, 8, 128), dtype=jnp.float32)
    out_big = jax.block_until_ready(temporal_avg_pool(x_big, dim=1))
    ref_big = jnp.mean(x_big, axis=1)
    assert out_big.shape == (16, 8, 128)
    assert jnp.allclose(out_big, ref_big, atol=1e-5, rtol=1e-5)

    # 3) Awkward shapes with forced tiny tiles: multi-tile time reduction with
    #    a static masked tail, split/overhanging feature blocks, batch < 8.
    x_odd = jax.random.normal(k3, (5, 199, 3, 100), dtype=jnp.float32)
    out_odd = jax.block_until_ready(
        temporal_avg_pool(x_odd, dim=1, min_pallas_bytes=0,
                          tile_budget_bytes=64 * 1024, tt_max=64))
    ref_odd = jnp.mean(x_odd, axis=1)
    assert out_odd.shape == (5, 3, 100)
    assert jnp.allclose(out_odd, ref_odd, atol=1e-5, rtol=1e-5)

    # 4) bf16 input + non-default dim (time axis is dim=2): exercises the
    #    reshape-based dim handling, bf16 (16-row) chunking, and TB growth.
    x_bf16 = jax.random.normal(k4, (8, 4, 96, 64), dtype=jnp.bfloat16)
    out_bf16 = jax.block_until_ready(
        temporal_avg_pool(x_bf16, dim=2, min_pallas_bytes=0))
    ref_bf16 = jnp.mean(x_bf16.astype(jnp.float32), axis=2).astype(jnp.bfloat16)
    assert out_bf16.shape == (8, 4, 64) and out_bf16.dtype == jnp.bfloat16
    assert jnp.allclose(out_bf16.astype(jnp.float32),
                        ref_bf16.astype(jnp.float32), atol=2e-2, rtol=2e-2)

    print("KERNEL_OK")
</pallas_src>

<mosaic_0001>
module attributes {stable_mosaic.version = 11 : i64} {
  func.func @kernel(%arg0: i32, %arg1: i32, %arg2: i32, %arg3: memref<8x32x1024xf32, #tpu.memory_space<vmem>>, %arg4: memref<8x1024xf32, #tpu.memory_space<vmem>>, %arg5: memref<8x1024xf32, #tpu.memory_space<vmem>>) attributes {dimension_semantics = [#tpu.dimension_semantics<parallel>, #tpu.dimension_semantics<parallel>, #tpu.dimension_semantics<arbitrary>], iteration_bounds = array<i64: 2, 1, 1>, scalar_prefetch = 0 : i64, scratch_operands = 1 : i64, tpu.core_type = #tpu.core_type<tc>, window_params = [{transform_indices = @transform_0, window_bounds = array<i64: 8, 32, 1024>}, {transform_indices = @transform_1, window_bounds = array<i64: 8, 1024>}]} {
    %c0_i32 = arith.constant 0 : i32
    %0 = arith.cmpi eq, %arg2, %c0_i32 : i32
    %1 = arith.extui %0 : i1 to i32
    %c0_i32_0 = arith.constant 0 : i32
    %2 = arith.cmpi ne, %1, %c0_i32_0 : i32
    scf.if %2 {
      %cst_22 = arith.constant 0.000000e+00 : f32
      %34 = vector.broadcast %cst_22 : f32 to vector<8x1024xf32>
      %c0_23 = arith.constant 0 : index
      %c0_24 = arith.constant 0 : index
      %35 = vector.load %arg5[%c0_23, %c0_24] : memref<8x1024xf32, #tpu.memory_space<vmem>>, vector<8x1024xf32>
      tpu.vector_store %arg5[%c0_23, %c0_24], %34 {strides = array<i32>} : memref<8x1024xf32, #tpu.memory_space<vmem>>, vector<8x1024xf32>,
    } else {
    }
    %c0 = arith.constant 0 : index
    %c0_1 = arith.constant 0 : index
    %3 = vector.load %arg5[%c0, %c0_1] : memref<8x1024xf32, #tpu.memory_space<vmem>>, vector<8x1024xf32>
    %cst = arith.constant 0.000000e+00 : f32
    %4 = vector.broadcast %cst : f32 to vector<8x1024xf32>
    %c0_i32_2 = arith.constant 0 : i32
    %c8_i32 = arith.constant 8 : i32
    %5 = arith.muli %c0_i32_2, %c8_i32 : i32
    %6 = tpu.assume_multiple %5, 8 : i32
    %c0_3 = arith.constant 0 : index
    %7 = arith.index_cast %6 : i32 to index
    %c0_4 = arith.constant 0 : index
    %8 = vector.load %arg3[%c0_3, %7, %c0_4] : memref<8x32x1024xf32, #tpu.memory_space<vmem>>, vector<8x8x1024xf32>
    %cst_5 = arith.constant dense<0.000000e+00> : vector<8x1024xf32>
    %9 = vector.multi_reduction <add>, %8, %cst_5 [1] : vector<8x8x1024xf32> to vector<8x1024xf32>
    %10 = arith.addf %4, %9 : vector<8x1024xf32>
    %c1_i32 = arith.constant 1 : i32
    %c8_i32_6 = arith.constant 8 : i32
    %11 = arith.muli %c1_i32, %c8_i32_6 : i32
    %12 = tpu.assume_multiple %11, 8 : i32
    %c0_7 = arith.constant 0 : index
    %13 = arith.index_cast %12 : i32 to index
    %c0_8 = arith.constant 0 : index
    %14 = vector.load %arg3[%c0_7, %13, %c0_8] : memref<8x32x1024xf32, #tpu.memory_space<vmem>>, vector<8x8x1024xf32>
    %cst_9 = arith.constant dense<0.000000e+00> : vector<8x1024xf32>
    %15 = vector.multi_reduction <add>, %14, %cst_9 [1] : vector<8x8x1024xf32> to vector<8x1024xf32>
    %16 = arith.addf %10, %15 : vector<8x1024xf32>
    %c2_i32 = arith.constant 2 : i32
    %c8_i32_10 = arith.constant 8 : i32
    %17 = arith.muli %c2_i32, %c8_i32_10 : i32
    %18 = tpu.assume_multiple %17, 8 : i32
    %c0_11 = arith.constant 0 : index
    %19 = arith.index_cast %18 : i32 to index
    %c0_12 = arith.constant 0 : index
    %20 = vector.load %arg3[%c0_11, %19, %c0_12] : memref<8x32x1024xf32, #tpu.memory_space<vmem>>, vector<8x8x1024xf32>
    %cst_13 = arith.constant dense<0.000000e+00> : vector<8x1024xf32>
    %21 = vector.multi_reduction <add>, %20, %cst_13 [1] : vector<8x8x1024xf32> to vector<8x1024xf32>
    %22 = arith.addf %16, %21 : vector<8x1024xf32>
    %c3_i32 = arith.constant 3 : i32
    %c8_i32_14 = arith.constant 8 : i32
    %23 = arith.muli %c3_i32, %c8_i32_14 : i32
    %24 = tpu.assume_multiple %23, 8 : i32
    %c0_15 = arith.constant 0 : index
    %25 = arith.index_cast %24 : i32 to index
    %c0_16 = arith.constant 0 : index
    %26 = vector.load %arg3[%c0_15, %25, %c0_16] : memref<8x32x1024xf32, #tpu.memory_space<vmem>>, vector<8x8x1024xf32>
    %cst_17 = arith.constant dense<0.000000e+00> : vector<8x1024xf32>
    %27 = vector.multi_reduction <add>, %26, %cst_17 [1] : vector<8x8x1024xf32> to vector<8x1024xf32>
    %28 = arith.addf %22, %27 : vector<8x1024xf32>
    %c4_i32 = arith.constant 4 : i32
    %29 = arith.addf %3, %28 : vector<8x1024xf32>
    %c0_18 = arith.constant 0 : index
    %c0_19 = arith.constant 0 : index
    %30 = vector.load %arg5[%c0_18, %c0_19] : memref<8x1024xf32, #tpu.memory_space<vmem>>, vector<8x1024xf32>
    tpu.vector_store %arg5[%c0_18, %c0_19], %29 {strides = array<i32>} : memref<8x1024xf32, #tpu.memory_space<vmem>>, vector<8x1024xf32>,
    %c0_i32_20 = arith.constant 0 : i32
    %31 = arith.cmpi eq, %arg2, %c0_i32_20 : i32
    %32 = arith.extui %31 : i1 to i32
    %c0_i32_21 = arith.constant 0 : i32
    %33 = arith.cmpi ne, %32, %c0_i32_21 : i32
    scf.if %33 {
      %c0_22 = arith.constant 0 : index
      %c0_23 = arith.constant 0 : index
      %34 = vector.load %arg5[%c0_22, %c0_23] : memref<8x1024xf32, #tpu.memory_space<vmem>>, vector<8x1024xf32>
      %cst_24 = arith.constant 3.125000e-02 : f32
      %35 = vector.broadcast %cst_24 : f32 to vector<8x1024xf32>
      %36 = arith.mulf %34, %35 : vector<8x1024xf32>
      %c0_25 = arith.constant 0 : index
      %c0_26 = arith.constant 0 : index
      %37 = vector.load %arg4[%c0_25, %c0_26] : memref<8x1024xf32, #tpu.memory_space<vmem>>, vector<8x1024xf32>
      tpu.vector_store %arg4[%c0_25, %c0_26], %36 {strides = array<i32>} : memref<8x1024xf32, #tpu.memory_space<vmem>>, vector<8x1024xf32>,
    } else {
    }
    return
  }
  func.func @transform_0(%arg0: i32, %arg1: i32, %arg2: i32) -> (i32, i32, i32) {
    %c0_i32 = arith.constant 0 : i32
    return %arg0, %arg2, %arg1 : i32, i32, i32
  }
  func.func @transform_1(%arg0: i32, %arg1: i32, %arg2: i32) -> (i32, i32) {
    %c0_i32 = arith.constant 0 : i32
    return %arg0, %arg1 : i32, i32
  }
}

</mosaic_0001>

<llo_original>
// kernel: tpu_custom_call.1
$region0: #{tpu_custom_call.1}
  #allocation0 [shape = 'u32[]', space=smem, size = 0x4, offset = 0x4, fixed_abs, tag = 'smem constant byte address 0x4 - core index']
  #allocation1 [shape = 'u32[144,128]{1,0:T(1,128)}', space=vmem, size = 0x12000, scoped, tag = 'internal scratch']
  #allocation2 [shape = 'f32[8,1024]{1,0:T(8,128)}', space=vmem, size = 0x8000, scoped, tag = 'scratch operand']
  %s0 = inlined_call_operand.hbm [shape: f32[16,32,1024], index: 0, kind: input, shape index: {}]
  %s1 = inlined_call_operand.hbm [shape: f32[16,1024], index: 1, kind: output, shape index: {}]
  %s2 = sld [smem:[#allocation0]]
  $region49: #{tpu_custom_call.1} parent=0
    _
  %s4 = ssub.s32 1, %s2
  %s5 = scalar_select 0, %s4, %s2
  $region1: #{tpu_custom_call.1} parent=0
    #allocation3 [shape = 'u8[2097152]{0}', space=vmem, size = 0x200000, scoped, tag = 'input window, operand 0']
    #allocation4 [shape = 's32[2]{0}', space=sflag, size = 0x8, scoped, tag = 'scoped memory for tpu_custom_call.1']
    #allocation5 [shape = 's32[2]{0}', space=sflag, size = 0x8, scoped, tag = 'scoped memory for tpu_custom_call.1']
    #allocation6 [shape = 'u8[65536]{0}', space=vmem, size = 0x10000, scoped, tag = 'output window, operand 0']
    %6 = vsyncpa [#allocation4], 0
    %s7 = scalar_lea.sflag [#allocation4], 1
    %8 = vsyncpa %s7, 0
    %9 = vsyncpa [#allocation5], 0
    %s10 = scalar_lea.sflag [#allocation5], 1
    %11 = vsyncpa %s10, 0
    loop: start=0, step=1, limit=4
    $region2: #{tpu_custom_call.1} parent=1 // loop_pre_header
      _
    $region3: #{tpu_custom_call.1} parent=1 // loop_header
      %s13 = sphi 0, %s17
      %p14 = scmp.ge.s32.totalorder %s13, 4
      %s20 = sphi 0, %s39
      %s21 = sphi 0, %s35
      %s22 = sphi 0, %s31
      %s23 = sphi 0, %s20
      %s24 = sphi 0, %s21
      %s25 = sphi 0, %s22
      %s26 = sphi 0, %s23
      %s27 = sphi 0, %s24
      %s28 = sphi 0, %s25
      %s46 = sphi 0, %s48
      %s49 = sphi 0, %s46
      %s50 = sphi 0, %s49
      %s66 = sphi 0, %s50
      %s74 = sphi 0, %s76
      %s77 = sphi 0, %s74
      %s78 = sphi 0, %s77
      %s94 = sphi 0, %s78
    $region4: #{tpu_custom_call.1} parent=1 // loop_header_branch
      %16 = sbr.rel (%p14) target = $region8
    $region5: #{tpu_custom_call.1} parent=1 // loop_body
      %s18 = ssub.s32 %s13, 1
      %s19 = ssub.s32 %s13, 2
      %s29 = sadd.s32 1, %s22
      %p30 = scmp.ge.s32.totalorder %s29, 1
      %s31 = scalar_select %p30, 0, %s29
      %s32 = sadd.s32 1, %s21
      %s33 = scalar_select %p30, %s32, %s21
      %p34 = scmp.ge.s32.totalorder %s33, 1
      %s35 = scalar_select %p34, 0, %s33
      %s36 = sadd.s32 1, %s20
      %s37 = scalar_select %p34, %s36, %s20
      %p38 = scmp.ge.s32.totalorder %s37, 2
      %s39 = scalar_select %p38, 0, %s37
      %s40 = ssub.s32 %s20, %s39
      %s41 = ssub.s32 %s22, %s31
      %s42 = sor.u32 %s40, %s41
      %s43 = ssub.s32 %s21, %s35
      %s44 = sor.u32 %s42, %s43
      %p45 = scmp.eq.s32.totalorder %s44, 0
      %s47 = sadd.s32 %s46, 1
      %s48 = scalar_select %p45, %s46, %s47
      %p51 = pneg %p45
      %p52 = scmp.eq.s32.totalorder %s13, 1
      %p53 = por %p51, %p52
      %p54 = scmp.ne.s32.totalorder %s46, %s49
      %p55 = scmp.eq.s32.totalorder %s13, 0
      %p56 = por %p54, %p55
      %p57 = scmp.ne.s32.totalorder %s46, %s49
      %p58 = scmp.eq.s32.totalorder %s18, 1
      %p59 = por %p57, %p58
      %p60 = scmp.ne.s32.totalorder %s49, %s50
      %p61 = scmp.eq.s32.totalorder %s18, 0
      %p62 = por %p60, %p61
      %p63 = scmp.ne.s32.totalorder %s49, %s50
      %p64 = scmp.eq.s32.totalorder %s19, 1
      %p65 = por %p63, %p64
      %p67 = scmp.ne.s32.totalorder %s50, %s66
      %p68 = scmp.eq.s32.totalorder %s19, 0
      %p69 = por %p67, %p68
      %s70 = ssub.s32 %s20, %s39
      %s71 = ssub.s32 %s21, %s35
      %s72 = sor.u32 %s70, %s71
      %p73 = scmp.eq.s32.totalorder %s72, 0
      %s75 = sadd.s32 %s74, 1
      %s76 = scalar_select %p73, %s74, %s75
      %p79 = pneg %p73
      %p80 = scmp.eq.s32.totalorder %s13, 1
      %p81 = por %p79, %p80
      %p82 = scmp.ne.s32.totalorder %s74, %s77
      %p83 = scmp.eq.s32.totalorder %s13, 0
      %p84 = por %p82, %p83
      %p85 = scmp.ne.s32.totalorder %s74, %s77
      %p86 = scmp.eq.s32.totalorder %s18, 1
      %p87 = por %p85, %p86
      %p88 = scmp.ne.s32.totalorder %s77, %s78
      %p89 = scmp.eq.s32.totalorder %s18, 0
      %p90 = por %p88, %p89
      %p91 = scmp.ne.s32.totalorder %s77, %s78
      %p92 = scmp.eq.s32.totalorder %s19, 1
      %p93 = por %p91, %p92
      %p95 = scmp.ne.s32.totalorder %s78, %s94
      %p96 = scmp.eq.s32.totalorder %s19, 0
      %p97 = por %p95, %p96
      %p98 = scmp.le.s32.totalorder 1, %s13
      %p99 = scmp.lt.s32.totalorder %s13, 3
      %p100 = pnand %p98, %p99
      %p101 = pneg %p100
      // Predicated region
      $region9: #{tpu_custom_call.1} parent=5 // pred_check
        _
      $region10: #{tpu_custom_call.1} parent=5 // pred_check_branch
        %103 = sbr.rel (%p100) target = $region12
      $region11: #{tpu_custom_call.1} parent=5 // pred_region
        %s104 = ssub.s32 %s13, 1
      $region12: #{tpu_custom_call.1} parent=5 // pred_fallthru
        _
      %p105 = scmp.lt.s32.totalorder %s13, 2
      // Predicated region
      $region13: #{tpu_custom_call.1} parent=5 // pred_check
        %p106 = pneg %p105
      $region14: #{tpu_custom_call.1} parent=5 // pred_check_branch
        %108 = sbr.rel (%p106) target = $region16
      $region15: #{tpu_custom_call.1} parent=5 // pred_region
        // Predicated region
        $region17: #{tpu_custom_call.1} parent=15 // pred_check
          %p109 = pneg %p56
        $region18: #{tpu_custom_call.1} parent=15 // pred_check_branch
          %111 = sbr.rel (%p109) target = $region20
        $region19: #{tpu_custom_call.1} parent=15 // pred_region
          %s112 = sand.u32 %s46, 1
          %s113 = scalar_lea.sflag [#allocation4], %s112
          %s114 = sand.u32 %s46, 1
          %s115 = smul.addr %s114, 2048
          %s116 = scalar_lea.vmem [#allocation3], %s115
          %s117 = smul.u32 8, %s20
          %s118 = smul.u32 4, %s22
          %s119 = smul.u32 8, %s21
          %s121 = ssub.s32 32768, 32768
          %122 = vsyncadd %s113, %s121
          %s123 = smul.addr %s118, 8
          %s124 = sadd.s32 %s119, %s123
          %s125 = smul.addr %s117, 32
          %s126 = sadd.s32 %s124, %s125
          %s127 = smul.addr %s126, 128
          %s128 = scalar_lea.hbm %s0, %s127
          %s129 = sshll.u32 %s116, 4
          %s130 = int_to_ptr.vmem [resolvable:$true] %s129
          %135 = dma.hbm_to_vmem [thread:$0]  %s128, 32768, %s130, %s113, 1024, 1024, 64
        $region20: #{tpu_custom_call.1} parent=15 // pred_fallthru
          _
      $region16: #{tpu_custom_call.1} parent=5 // pred_fallthru
        _
      %p136 = scmp.le.s32.totalorder 1, %s13
      %p137 = scmp.lt.s32.totalorder %s13, 3
      %p138 = pnand %p136, %p137
      %p139 = pneg %p138
      // Predicated region
      $region21: #{tpu_custom_call.1} parent=5 // pred_check
        _
      $region22: #{tpu_custom_call.1} parent=5 // pred_check_branch
        %141 = sbr.rel (%p138) target = $region24
      $region23: #{tpu_custom_call.1} parent=5 // pred_region
        %s142 = ssub.s32 %s13, 1
        %s143 = sand.u32 %s49, 1
        %s144 = scalar_lea.sflag [#allocation4], %s143
        %s145 = sand.u32 %s49, 1
        %s146 = smul.addr %s145, 2048
        %s147 = scalar_lea.vmem [#allocation3], %s146
        // Predicated region
        $region25: #{tpu_custom_call.1} parent=23 // pred_check
          %p148 = pneg %p62
        $region26: #{tpu_custom_call.1} parent=23 // pred_check_branch
          %150 = sbr.rel (%p148) target = $region28
        $region27: #{tpu_custom_call.1} parent=23 // pred_region
          %151 = dma.done %s144, 32768
        $region28: #{tpu_custom_call.1} parent=23 // pred_fallthru
          _
        %s152 = sand.u32 %s49, 1
        %s153 = scalar_lea.sflag [#allocation4], %s152
        %s154 = sand.u32 %s49, 1
        %s155 = smul.addr %s154, 2048
        %s156 = scalar_lea.vmem [#allocation3], %s155
        %p157 = pneg %p62
        %p158 = pneg %p59
        %p159 = pneg %p90
        %p160 = pneg %p87
        %s161 = sand.u32 %s77, 1
        %s162 = scalar_lea.sflag [#allocation5], %s161
        %s163 = sand.u32 %s77, 1
        %s164 = smul.addr %s163, 64
        %s165 = scalar_lea.vmem [#allocation6], %s164
        %s166 = smul.u32 8, %s23
        %s167 = smul.u32 4, %s25
        %s168 = smul.u32 8, %s24
        %s169 = smul.u32 8, %s24
        %p170 = scmp.eq.s32.totalorder %s25, 0
        // Predicated region
        $region29: #{tpu_custom_call.1} parent=23 // pred_check
          %p171 = pneg %p170
        $region30: #{tpu_custom_call.1} parent=23 // pred_check_branch
          %173 = sbr.rel (%p171) target = $region32
        $region31: #{tpu_custom_call.1} parent=23 // pred_region
          %174 = vst [vmem:[#allocation2] sm:$0xff] 0.0
          %175 = vst [vmem:[#allocation2 + $0x8] sm:$0xff] 0.0
          %176 = vst [vmem:[#allocation2 + $0x10] sm:$0xff] 0.0
          %177 = vst [vmem:[#allocation2 + $0x18] sm:$0xff] 0.0
          %178 = vst [vmem:[#allocation2 + $0x20] sm:$0xff] 0.0
          %179 = vst [vmem:[#allocation2 + $0x28] sm:$0xff] 0.0
          %180 = vst [vmem:[#allocation2 + $0x30] sm:$0xff] 0.0
          %181 = vst [vmem:[#allocation2 + $0x38] sm:$0xff] 0.0
        $region32: #{tpu_custom_call.1} parent=23 // pred_fallthru
          _
        %v182 = vld [vmem:[#allocation2] sm:$0xff]
        %v183 = vld [vmem:[#allocation2 + $0x8] sm:$0xff]
        %v184 = vld [vmem:[#allocation2 + $0x10] sm:$0xff]
        %v185 = vld [vmem:[#allocation2 + $0x18] sm:$0xff]
        %v186 = vld [vmem:[#allocation2 + $0x20] sm:$0xff]
        %v187 = vld [vmem:[#allocation2 + $0x28] sm:$0xff]
        %v188 = vld [vmem:[#allocation2 + $0x30] sm:$0xff]
        %v189 = vld [vmem:[#allocation2 + $0x38] sm:$0xff]
        %s190 = smul.u32 0, 8
        %s191 = smul.addr %s190, 8
        %s192 = scalar_lea.vmem %s147, %s191 [#allocation3]
        %v193 = vld [vmem:[%s192] sm:$0xff]
        %v194 = vld [vmem:[%s192 + $0x8] sm:$0xff]
        %v195 = vld [vmem:[%s192 + $0x10] sm:$0xff]
        %v196 = vld [vmem:[%s192 + $0x18] sm:$0xff]
        %v197 = vld [vmem:[%s192 + $0x20] sm:$0xff]
        %v198 = vld [vmem:[%s192 + $0x28] sm:$0xff]
        %v199 = vld [vmem:[%s192 + $0x30] sm:$0xff]
        %v200 = vld [vmem:[%s192 + $0x38] sm:$0xff]
        %v201 = vld [vmem:[%s192 + $0x100] sm:$0xff]
        %v202 = vld [vmem:[%s192 + $0x108] sm:$0xff]
        %v203 = vld [vmem:[%s192 + $0x110] sm:$0xff]
        %v204 = vld [vmem:[%s192 + $0x118] sm:$0xff]
        %v205 = vld [vmem:[%s192 + $0x120] sm:$0xff]
        %v206 = vld [vmem:[%s192 + $0x128] sm:$0xff]
        %v207 = vld [vmem:[%s192 + $0x130] sm:$0xff]
        %v208 = vld [vmem:[%s192 + $0x138] sm:$0xff]
        %v209 = vld [vmem:[%s192 + $0x200] sm:$0xff]
        %v210 = vld [vmem:[%s192 + $0x208] sm:$0xff]
        %v211 = vld [vmem:[%s192 + $0x210] sm:$0xff]
        %v212 = vld [vmem:[%s192 + $0x218] sm:$0xff]
        %v213 = vld [vmem:[%s192 + $0x220] sm:$0xff]
        %v214 = vld [vmem:[%s192 + $0x228] sm:$0xff]
        %v215 = vld [vmem:[%s192 + $0x230] sm:$0xff]
        %v216 = vld [vmem:[%s192 + $0x238] sm:$0xff]
        %v217 = vld [vmem:[%s192 + $0x300] sm:$0xff]
        %v218 = vld [vmem:[%s192 + $0x308] sm:$0xff]
        %v219 = vld [vmem:[%s192 + $0x310] sm:$0xff]
        %v220 = vld [vmem:[%s192 + $0x318] sm:$0xff]
        %v221 = vld [vmem:[%s192 + $0x320] sm:$0xff]
        %v222 = vld [vmem:[%s192 + $0x328] sm:$0xff]
        %v223 = vld [vmem:[%s192 + $0x330] sm:$0xff]
        %v224 = vld [vmem:[%s192 + $0x338] sm:$0xff]
        %v225 = vld [vmem:[%s192 + $0x400] sm:$0xff]
        %v226 = vld [vmem:[%s192 + $0x408] sm:$0xff]
        %v227 = vld [vmem:[%s192 + $0x410] sm:$0xff]
        %v228 = vld [vmem:[%s192 + $0x418] sm:$0xff]
        %v229 = vld [vmem:[%s192 + $0x420] sm:$0xff]
        %v230 = vld [vmem:[%s192 + $0x428] sm:$0xff]
        %v231 = vld [vmem:[%s192 + $0x430] sm:$0xff]
        %v232 = vld [vmem:[%s192 + $0x438] sm:$0xff]
        %v233 = vld [vmem:[%s192 + $0x500] sm:$0xff]
        %v234 = vld [vmem:[%s192 + $0x508] sm:$0xff]
        %v235 = vld [vmem:[%s192 + $0x510] sm:$0xff]
        %v236 = vld [vmem:[%s192 + $0x518] sm:$0xff]
        %v237 = vld [vmem:[%s192 + $0x520] sm:$0xff]
        %v238 = vld [vmem:[%s192 + $0x528] sm:$0xff]
        %v239 = vld [vmem:[%s192 + $0x530] sm:$0xff]
        %v240 = vld [vmem:[%s192 + $0x538] sm:$0xff]
        %v241 = vld [vmem:[%s192 + $0x600] sm:$0xff]
        %v242 = vld [vmem:[%s192 + $0x608] sm:$0xff]
        %v243 = vld [vmem:[%s192 + $0x610] sm:$0xff]
        %v244 = vld [vmem:[%s192 + $0x618] sm:$0xff]
        %v245 = vld [vmem:[%s192 + $0x620] sm:$0xff]
        %v246 = vld [vmem:[%s192 + $0x628] sm:$0xff]
        %v247 = vld [vmem:[%s192 + $0x630] sm:$0xff]
        %v248 = vld [vmem:[%s192 + $0x638] sm:$0xff]
        %v249 = vld [vmem:[%s192 + $0x700] sm:$0xff]
        %v250 = vld [vmem:[%s192 + $0x708] sm:$0xff]
        %v251 = vld [vmem:[%s192 + $0x710] sm:$0xff]
        %v252 = vld [vmem:[%s192 + $0x718] sm:$0xff]
        %v253 = vld [vmem:[%s192 + $0x720] sm:$0xff]
        %v254 = vld [vmem:[%s192 + $0x728] sm:$0xff]
        %v255 = vld [vmem:[%s192 + $0x730] sm:$0xff]
        %v256 = vld [vmem:[%s192 + $0x738] sm:$0xff]
        %v257 = vrot.slane %v193, 4
        %v258 = vadd.f32 %v193, %v257
        %v259 = vrot.slane %v258, 2
        %v260 = vadd.f32 %v258, %v259
        %v261 = vrot.slane %v260, 1
        %v262 = vadd.f32 %v260, %v261
        %v263 = vrot.slane %v194, 4
        %v264 = vadd.f32 %v194, %v263
        %v265 = vrot.slane %v264, 2
        %v266 = vadd.f32 %v264, %v265
        %v267 = vrot.slane %v266, 1
        %v268 = vadd.f32 %v266, %v267
        %v269 = vrot.slane %v195, 4
        %v270 = vadd.f32 %v195, %v269
        %v271 = vrot.slane %v270, 2
        %v272 = vadd.f32 %v270, %v271
        %v273 = vrot.slane %v272, 1
        %v274 = vadd.f32 %v272, %v273
        %v275 = vrot.slane %v196, 4
        %v276 = vadd.f32 %v196, %v275
        %v277 = vrot.slane %v276, 2
        %v278 = vadd.f32 %v276, %v277
        %v279 = vrot.slane %v278, 1
        %v280 = vadd.f32 %v278, %v279
        %v281 = vrot.slane %v197, 4
        %v282 = vadd.f32 %v197, %v281
        %v283 = vrot.slane %v282, 2
        %v284 = vadd.f32 %v282, %v283
        %v285 = vrot.slane %v284, 1
        %v286 = vadd.f32 %v284, %v285
        %v287 = vrot.slane %v198, 4
        %v288 = vadd.f32 %v198, %v287
        %v289 = vrot.slane %v288, 2
        %v290 = vadd.f32 %v288, %v289
        %v291 = vrot.slane %v290, 1
        %v292 = vadd.f32 %v290, %v291
        %v293 = vrot.slane %v199, 4
        %v294 = vadd.f32 %v199, %v293
        %v295 = vrot.slane %v294, 2
        %v296 = vadd.f32 %v294, %v295
        %v297 = vrot.slane %v296, 1
        %v298 = vadd.f32 %v296, %v297
        %v299 = vrot.slane %v200, 4
        %v300 = vadd.f32 %v200, %v299
        %v301 = vrot.slane %v300, 2
        %v302 = vadd.f32 %v300, %v301
        %v303 = vrot.slane %v302, 1
        %v304 = vadd.f32 %v302, %v303
        %v305 = vrot.slane %v201, 4
        %v306 = vadd.f32 %v201, %v305
        %v307 = vrot.slane %v306, 2
        %v308 = vadd.f32 %v306, %v307
        %v309 = vrot.slane %v308, 1
        %v310 = vadd.f32 %v308, %v309
        %v311 = vrot.slane %v202, 4
        %v312 = vadd.f32 %v202, %v311
        %v313 = vrot.slane %v312, 2
        %v314 = vadd.f32 %v312, %v313
        %v315 = vrot.slane %v314, 1
        %v316 = vadd.f32 %v314, %v315
        %v317 = vrot.slane %v203, 4
        %v318 = vadd.f32 %v203, %v317
        %v319 = vrot.slane %v318, 2
        %v320 = vadd.f32 %v318, %v319
        %v321 = vrot.slane %v320, 1
        %v322 = vadd.f32 %v320, %v321
        %v323 = vrot.slane %v204, 4
        %v324 = vadd.f32 %v204, %v323
        %v325 = vrot.slane %v324, 2
        %v326 = vadd.f32 %v324, %v325
        %v327 = vrot.slane %v326, 1
        %v328 = vadd.f32 %v326, %v327
        %v329 = vrot.slane %v205, 4
        %v330 = vadd.f32 %v205, %v329
        %v331 = vrot.slane %v330, 2
        %v332 = vadd.f32 %v330, %v331
        %v333 = vrot.slane %v332, 1
        %v334 = vadd.f32 %v332, %v333
        %v335 = vrot.slane %v206, 4
        %v336 = vadd.f32 %v206, %v335
        %v337 = vrot.slane %v336, 2
        %v338 = vadd.f32 %v336, %v337
        %v339 = vrot.slane %v338, 1
        %v340 = vadd.f32 %v338, %v339
        %v341 = vrot.slane %v207, 4
        %v342 = vadd.f32 %v207, %v341
        %v343 = vrot.slane %v342, 2
        %v344 = vadd.f32 %v342, %v343
        %v345 = vrot.slane %v344, 1
        %v346 = vadd.f32 %v344, %v345
        %v347 = vrot.slane %v208, 4
        %v348 = vadd.f32 %v208, %v347
        %v349 = vrot.slane %v348, 2
        %v350 = vadd.f32 %v348, %v349
        %v351 = vrot.slane %v350, 1
        %v352 = vadd.f32 %v350, %v351
        %v353 = vrot.slane %v209, 4
        %v354 = vadd.f32 %v209, %v353
        %v355 = vrot.slane %v354, 2
        %v356 = vadd.f32 %v354, %v355
        %v357 = vrot.slane %v356, 1
        %v358 = vadd.f32 %v356, %v357
        %v359 = vrot.slane %v210, 4
        %v360 = vadd.f32 %v210, %v359
        %v361 = vrot.slane %v360, 2
        %v362 = vadd.f32 %v360, %v361
        %v363 = vrot.slane %v362, 1
        %v364 = vadd.f32 %v362, %v363
        %v365 = vrot.slane %v211, 4
        %v366 = vadd.f32 %v211, %v365
        %v367 = vrot.slane %v366, 2
        %v368 = vadd.f32 %v366, %v367
        %v369 = vrot.slane %v368, 1
        %v370 = vadd.f32 %v368, %v369
        %v371 = vrot.slane %v212, 4
        %v372 = vadd.f32 %v212, %v371
        %v373 = vrot.slane %v372, 2
        %v374 = vadd.f32 %v372, %v373
        %v375 = vrot.slane %v374, 1
        %v376 = vadd.f32 %v374, %v375
        %v377 = vrot.slane %v213, 4
        %v378 = vadd.f32 %v213, %v377
        %v379 = vrot.slane %v378, 2
        %v380 = vadd.f32 %v378, %v379
        %v381 = vrot.slane %v380, 1
        %v382 = vadd.f32 %v380, %v381
        %v383 = vrot.slane %v214, 4
        %v384 = vadd.f32 %v214, %v383
        %v385 = vrot.slane %v384, 2
        %v386 = vadd.f32 %v384, %v385
        %v387 = vrot.slane %v386, 1
        %v388 = vadd.f32 %v386, %v387
        %v389 = vrot.slane %v215, 4
        %v390 = vadd.f32 %v215, %v389
        %v391 = vrot.slane %v390, 2
        %v392 = vadd.f32 %v390, %v391
        %v393 = vrot.slane %v392, 1
        %v394 = vadd.f32 %v392, %v393
        %v395 = vrot.slane %v216, 4
        %v396 = vadd.f32 %v216, %v395
        %v397 = vrot.slane %v396, 2
        %v398 = vadd.f32 %v396, %v397
        %v399 = vrot.slane %v398, 1
        %v400 = vadd.f32 %v398, %v399
        %v401 = vrot.slane %v217, 4
        %v402 = vadd.f32 %v217, %v401
        %v403 = vrot.slane %v402, 2
        %v404 = vadd.f32 %v402, %v403
        %v405 = vrot.slane %v404, 1
        %v406 = vadd.f32 %v404, %v405
        %v407 = vrot.slane %v218, 4
        %v408 = vadd.f32 %v218, %v407
        %v409 = vrot.slane %v408, 2
        %v410 = vadd.f32 %v408, %v409
        %v411 = vrot.slane %v410, 1
        %v412 = vadd.f32 %v410, %v411
        %v413 = vrot.slane %v219, 4
        %v414 = vadd.f32 %v219, %v413
        %v415 = vrot.slane %v414, 2
        %v416 = vadd.f32 %v414, %v415
        %v417 = vrot.slane %v416, 1
        %v418 = vadd.f32 %v416, %v417
        %v419 = vrot.slane %v220, 4
        %v420 = vadd.f32 %v220, %v419
        %v421 = vrot.slane %v420, 2
        %v422 = vadd.f32 %v420, %v421
        %v423 = vrot.slane %v422, 1
        %v424 = vadd.f32 %v422, %v423
        %v425 = vrot.slane %v221, 4
        %v426 = vadd.f32 %v221, %v425
        %v427 = vrot.slane %v426, 2
        %v428 = vadd.f32 %v426, %v427
        %v429 = vrot.slane %v428, 1
        %v430 = vadd.f32 %v428, %v429
        %v431 = vrot.slane %v222, 4
        %v432 = vadd.f32 %v222, %v431
        %v433 = vrot.slane %v432, 2
        %v434 = vadd.f32 %v432, %v433
        %v435 = vrot.slane %v434, 1
        %v436 = vadd.f32 %v434, %v435
        %v437 = vrot.slane %v223, 4
        %v438 = vadd.f32 %v223, %v437
        %v439 = vrot.slane %v438, 2
        %v440 = vadd.f32 %v438, %v439
        %v441 = vrot.slane %v440, 1
        %v442 = vadd.f32 %v440, %v441
        %v443 = vrot.slane %v224, 4
        %v444 = vadd.f32 %v224, %v443
        %v445 = vrot.slane %v444, 2
        %v446 = vadd.f32 %v444, %v445
        %v447 = vrot.slane %v446, 1
        %v448 = vadd.f32 %v446, %v447
        %v449 = vrot.slane %v225, 4
        %v450 = vadd.f32 %v225, %v449
        %v451 = vrot.slane %v450, 2
        %v452 = vadd.f32 %v450, %v451
        %v453 = vrot.slane %v452, 1
        %v454 = vadd.f32 %v452, %v453
        %v455 = vrot.slane %v226, 4
        %v456 = vadd.f32 %v226, %v455
        %v457 = vrot.slane %v456, 2
        %v458 = vadd.f32 %v456, %v457
        %v459 = vrot.slane %v458, 1
        %v460 = vadd.f32 %v458, %v459
        %v461 = vrot.slane %v227, 4
        %v462 = vadd.f32 %v227, %v461
        %v463 = vrot.slane %v462, 2
        %v464 = vadd.f32 %v462, %v463
        %v465 = vrot.slane %v464, 1
        %v466 = vadd.f32 %v464, %v465
        %v467 = vrot.slane %v228, 4
        %v468 = vadd.f32 %v228, %v467
        %v469 = vrot.slane %v468, 2
        %v470 = vadd.f32 %v468, %v469
        %v471 = vrot.slane %v470, 1
        %v472 = vadd.f32 %v470, %v471
        %v473 = vrot.slane %v229, 4
        %v474 = vadd.f32 %v229, %v473
        %v475 = vrot.slane %v474, 2
        %v476 = vadd.f32 %v474, %v475
        %v477 = vrot.slane %v476, 1
        %v478 = vadd.f32 %v476, %v477
        %v479 = vrot.slane %v230, 4
        %v480 = vadd.f32 %v230, %v479
        %v481 = vrot.slane %v480, 2
        %v482 = vadd.f32 %v480, %v481
        %v483 = vrot.slane %v482, 1
        %v484 = vadd.f32 %v482, %v483
        %v485 = vrot.slane %v231, 4
        %v486 = vadd.f32 %v231, %v485
        %v487 = vrot.slane %v486, 2
        %v488 = vadd.f32 %v486, %v487
        %v489 = vrot.slane %v488, 1
        %v490 = vadd.f32 %v488, %v489
        %v491 = vrot.slane %v232, 4
        %v492 = vadd.f32 %v232, %v491
        %v493 = vrot.slane %v492, 2
        %v494 = vadd.f32 %v492, %v493
        %v495 = vrot.slane %v494, 1
        %v496 = vadd.f32 %v494, %v495
        %v497 = vrot.slane %v233, 4
        %v498 = vadd.f32 %v233, %v497
        %v499 = vrot.slane %v498, 2
        %v500 = vadd.f32 %v498, %v499
        %v501 = vrot.slane %v500, 1
        %v502 = vadd.f32 %v500, %v501
        %v503 = vrot.slane %v234, 4
        %v504 = vadd.f32 %v234, %v503
        %v505 = vrot.slane %v504, 2
        %v506 = vadd.f32 %v504, %v505
        %v507 = vrot.slane %v506, 1
        %v508 = vadd.f32 %v506, %v507
        %v509 = vrot.slane %v235, 4
        %v510 = vadd.f32 %v235, %v509
        %v511 = vrot.slane %v510, 2
        %v512 = vadd.f32 %v510, %v511
        %v513 = vrot.slane %v512, 1
        %v514 = vadd.f32 %v512, %v513
        %v515 = vrot.slane %v236, 4
        %v516 = vadd.f32 %v236, %v515
        %v517 = vrot.slane %v516, 2
        %v518 = vadd.f32 %v516, %v517
        %v519 = vrot.slane %v518, 1
        %v520 = vadd.f32 %v518, %v519
        %v521 = vrot.slane %v237, 4
        %v522 = vadd.f32 %v237, %v521
        %v523 = vrot.slane %v522, 2
        %v524 = vadd.f32 %v522, %v523
        %v525 = vrot.slane %v524, 1
        %v526 = vadd.f32 %v524, %v525
        %v527 = vrot.slane %v238, 4
        %v528 = vadd.f32 %v238, %v527
        %v529 = vrot.slane %v528, 2
        %v530 = vadd.f32 %v528, %v529
        %v531 = vrot.slane %v530, 1
        %v532 = vadd.f32 %v530, %v531
        %v533 = vrot.slane %v239, 4
        %v534 = vadd.f32 %v239, %v533
        %v535 = vrot.slane %v534, 2
        %v536 = vadd.f32 %v534, %v535
        %v537 = vrot.slane %v536, 1
        %v538 = vadd.f32 %v536, %v537
        %v539 = vrot.slane %v240, 4
        %v540 = vadd.f32 %v240, %v539
        %v541 = vrot.slane %v540, 2
        %v542 = vadd.f32 %v540, %v541
        %v543 = vrot.slane %v542, 1
        %v544 = vadd.f32 %v542, %v543
        %v545 = vrot.slane %v241, 4
        %v546 = vadd.f32 %v241, %v545
        %v547 = vrot.slane %v546, 2
        %v548 = vadd.f32 %v546, %v547
        %v549 = vrot.slane %v548, 1
        %v550 = vadd.f32 %v548, %v549
        %v551 = vrot.slane %v242, 4
        %v552 = vadd.f32 %v242, %v551
        %v553 = vrot.slane %v552, 2
        %v554 = vadd.f32 %v552, %v553
        %v555 = vrot.slane %v554, 1
        %v556 = vadd.f32 %v554, %v555
        %v557 = vrot.slane %v243, 4
        %v558 = vadd.f32 %v243, %v557
        %v559 = vrot.slane %v558, 2
        %v560 = vadd.f32 %v558, %v559
        %v561 = vrot.slane %v560, 1
        %v562 = vadd.f32 %v560, %v561
        %v563 = vrot.slane %v244, 4
        %v564 = vadd.f32 %v244, %v563
        %v565 = vrot.slane %v564, 2
        %v566 = vadd.f32 %v564, %v565
        %v567 = vrot.slane %v566, 1
        %v568 = vadd.f32 %v566, %v567
        %v569 = vrot.slane %v245, 4
        %v570 = vadd.f32 %v245, %v569
        %v571 = vrot.slane %v570, 2
        %v572 = vadd.f32 %v570, %v571
        %v573 = vrot.slane %v572, 1
        %v574 = vadd.f32 %v572, %v573
        %v575 = vrot.slane %v246, 4
        %v576 = vadd.f32 %v246, %v575
        %v577 = vrot.slane %v576, 2
        %v578 = vadd.f32 %v576, %v577
        %v579 = vrot.slane %v578, 1
        %v580 = vadd.f32 %v578, %v579
        %v581 = vrot.slane %v247, 4
        %v582 = vadd.f32 %v247, %v581
        %v583 = vrot.slane %v582, 2
        %v584 = vadd.f32 %v582, %v583
        %v585 = vrot.slane %v584, 1
        %v586 = vadd.f32 %v584, %v585
        %v587 = vrot.slane %v248, 4
        %v588 = vadd.f32 %v248, %v587
        %v589 = vrot.slane %v588, 2
        %v590 = vadd.f32 %v588, %v589
        %v591 = vrot.slane %v590, 1
        %v592 = vadd.f32 %v590, %v591
        %v593 = vrot.slane %v249, 4
        %v594 = vadd.f32 %v249, %v593
        %v595 = vrot.slane %v594, 2
        %v596 = vadd.f32 %v594, %v595
        %v597 = vrot.slane %v596, 1
        %v598 = vadd.f32 %v596, %v597
        %v599 = vrot.slane %v250, 4
        %v600 = vadd.f32 %v250, %v599
        %v601 = vrot.slane %v600, 2
        %v602 = vadd.f32 %v600, %v601
        %v603 = vrot.slane %v602, 1
        %v604 = vadd.f32 %v602, %v603
        %v605 = vrot.slane %v251, 4
        %v606 = vadd.f32 %v251, %v605
        %v607 = vrot.slane %v606, 2
        %v608 = vadd.f32 %v606, %v607
        %v609 = vrot.slane %v608, 1
        %v610 = vadd.f32 %v608, %v609
        %v611 = vrot.slane %v252, 4
        %v612 = vadd.f32 %v252, %v611
        %v613 = vrot.slane %v612, 2
        %v614 = vadd.f32 %v612, %v613
        %v615 = vrot.slane %v614, 1
        %v616 = vadd.f32 %v614, %v615
        %v617 = vrot.slane %v253, 4
        %v618 = vadd.f32 %v253, %v617
        %v619 = vrot.slane %v618, 2
        %v620 = vadd.f32 %v618, %v619
        %v621 = vrot.slane %v620, 1
        %v622 = vadd.f32 %v620, %v621
        %v623 = vrot.slane %v254, 4
        %v624 = vadd.f32 %v254, %v623
        %v625 = vrot.slane %v624, 2
        %v626 = vadd.f32 %v624, %v625
        %v627 = vrot.slane %v626, 1
        %v628 = vadd.f32 %v626, %v627
        %v629 = vrot.slane %v255, 4
        %v630 = vadd.f32 %v255, %v629
        %v631 = vrot.slane %v630, 2
        %v632 = vadd.f32 %v630, %v631
        %v633 = vrot.slane %v632, 1
        %v634 = vadd.f32 %v632, %v633
        %v635 = vrot.slane %v256, 4
        %v636 = vadd.f32 %v256, %v635
        %v637 = vrot.slane %v636, 2
        %v638 = vadd.f32 %v636, %v637
        %v639 = vrot.slane %v638, 1
        %v640 = vadd.f32 %v638, %v639
        %v641 = vadd.f32 %v262, 0.0
        %v642 = vadd.f32 %v268, 0.0
        %v643 = vadd.f32 %v274, 0.0
        %v644 = vadd.f32 %v280, 0.0
        %v645 = vadd.f32 %v286, 0.0
        %v646 = vadd.f32 %v292, 0.0
        %v647 = vadd.f32 %v298, 0.0
        %v648 = vadd.f32 %v304, 0.0
        %v649 = vadd.f32 %v310, 0.0
        %v650 = vadd.f32 %v316, 0.0
        %v651 = vadd.f32 %v322, 0.0
        %v652 = vadd.f32 %v328, 0.0
        %v653 = vadd.f32 %v334, 0.0
        %v654 = vadd.f32 %v340, 0.0
        %v655 = vadd.f32 %v346, 0.0
        %v656 = vadd.f32 %v352, 0.0
        %v657 = vadd.f32 %v358, 0.0
        %v658 = vadd.f32 %v364, 0.0
        %v659 = vadd.f32 %v370, 0.0
        %v660 = vadd.f32 %v376, 0.0
        %v661 = vadd.f32 %v382, 0.0
        %v662 = vadd.f32 %v388, 0.0
        %v663 = vadd.f32 %v394, 0.0
        %v664 = vadd.f32 %v400, 0.0
        %v665 = vadd.f32 %v406, 0.0
        %v666 = vadd.f32 %v412, 0.0
        %v667 = vadd.f32 %v418, 0.0
        %v668 = vadd.f32 %v424, 0.0
        %v669 = vadd.f32 %v430, 0.0
        %v670 = vadd.f32 %v436, 0.0
        %v671 = vadd.f32 %v442, 0.0
        %v672 = vadd.f32 %v448, 0.0
        %v673 = vadd.f32 %v454, 0.0
        %v674 = vadd.f32 %v460, 0.0
        %v675 = vadd.f32 %v466, 0.0
        %v676 = vadd.f32 %v472, 0.0
        %v677 = vadd.f32 %v478, 0.0
        %v678 = vadd.f32 %v484, 0.0
        %v679 = vadd.f32 %v490, 0.0
        %v680 = vadd.f32 %v496, 0.0
        %v681 = vadd.f32 %v502, 0.0
        %v682 = vadd.f32 %v508, 0.0
        %v683 = vadd.f32 %v514, 0.0
        %v684 = vadd.f32 %v520, 0.0
        %v685 = vadd.f32 %v526, 0.0
        %v686 = vadd.f32 %v532, 0.0
        %v687 = vadd.f32 %v538, 0.0
        %v688 = vadd.f32 %v544, 0.0
        %v689 = vadd.f32 %v550, 0.0
        %v690 = vadd.f32 %v556, 0.0
        %v691 = vadd.f32 %v562, 0.0
        %v692 = vadd.f32 %v568, 0.0
        %v693 = vadd.f32 %v574, 0.0
        %v694 = vadd.f32 %v580, 0.0
        %v695 = vadd.f32 %v586, 0.0
        %v696 = vadd.f32 %v592, 0.0
        %v697 = vadd.f32 %v598, 0.0
        %v698 = vadd.f32 %v604, 0.0
        %v699 = vadd.f32 %v610, 0.0
        %v700 = vadd.f32 %v616, 0.0
        %v701 = vadd.f32 %v622, 0.0
        %v702 = vadd.f32 %v628, 0.0
        %v703 = vadd.f32 %v634, 0.0
        %v704 = vadd.f32 %v640, 0.0
        %s705 = smul.u32 1, 8
        %s706 = smul.addr %s705, 8
        %s707 = scalar_lea.vmem %s147, %s706 [#allocation3]
        %v708 = vld [vmem:[%s707] sm:$0xff]
        %v709 = vld [vmem:[%s707 + $0x8] sm:$0xff]
        %v710 = vld [vmem:[%s707 + $0x10] sm:$0xff]
        %v711 = vld [vmem:[%s707 + $0x18] sm:$0xff]
        %v712 = vld [vmem:[%s707 + $0x20] sm:$0xff]
        %v713 = vld [vmem:[%s707 + $0x28] sm:$0xff]
        %v714 = vld [vmem:[%s707 + $0x30] sm:$0xff]
        %v715 = vld [vmem:[%s707 + $0x38] sm:$0xff]
        %v716 = vld [vmem:[%s707 + $0x100] sm:$0xff]
        %v717 = vld [vmem:[%s707 + $0x108] sm:$0xff]
        %v718 = vld [vmem:[%s707 + $0x110] sm:$0xff]
        %v719 = vld [vmem:[%s707 + $0x118] sm:$0xff]
        %v720 = vld [vmem:[%s707 + $0x120] sm:$0xff]
        %v721 = vld [vmem:[%s707 + $0x128] sm:$0xff]
        %v722 = vld [vmem:[%s707 + $0x130] sm:$0xff]
        %v723 = vld [vmem:[%s707 + $0x138] sm:$0xff]
        %v724 = vld [vmem:[%s707 + $0x200] sm:$0xff]
        %v725 = vld [vmem:[%s707 + $0x208] sm:$0xff]
        %v726 = vld [vmem:[%s707 + $0x210] sm:$0xff]
        %v727 = vld [vmem:[%s707 + $0x218] sm:$0xff]
        %v728 = vld [vmem:[%s707 + $0x220] sm:$0xff]
        %v729 = vld [vmem:[%s707 + $0x228] sm:$0xff]
        %v730 = vld [vmem:[%s707 + $0x230] sm:$0xff]
        %v731 = vld [vmem:[%s707 + $0x238] sm:$0xff]
        %v732 = vld [vmem:[%s707 + $0x300] sm:$0xff]
        %v733 = vld [vmem:[%s707 + $0x308] sm:$0xff]
        %v734 = vld [vmem:[%s707 + $0x310] sm:$0xff]
        %v735 = vld [vmem:[%s707 + $0x318] sm:$0xff]
        %v736 = vld [vmem:[%s707 + $0x320] sm:$0xff]
        %v737 = vld [vmem:[%s707 + $0x328] sm:$0xff]
        %v738 = vld [vmem:[%s707 + $0x330] sm:$0xff]
        %v739 = vld [vmem:[%s707 + $0x338] sm:$0xff]
        %v740 = vld [vmem:[%s707 + $0x400] sm:$0xff]
        %v741 = vld [vmem:[%s707 + $0x408] sm:$0xff]
        %v742 = vld [vmem:[%s707 + $0x410] sm:$0xff]
        %v743 = vld [vmem:[%s707 + $0x418] sm:$0xff]
        %v744 = vld [vmem:[%s707 + $0x420] sm:$0xff]
        %v745 = vld [vmem:[%s707 + $0x428] sm:$0xff]
        %v746 = vld [vmem:[%s707 + $0x430] sm:$0xff]
        %v747 = vld [vmem:[%s707 + $0x438] sm:$0xff]
        %v748 = vld [vmem:[%s707 + $0x500] sm:$0xff]
        %v749 = vld [vmem:[%s707 + $0x508] sm:$0xff]
        %v750 = vld [vmem:[%s707 + $0x510] sm:$0xff]
        %v751 = vld [vmem:[%s707 + $0x518] sm:$0xff]
        %v752 = vld [vmem:[%s707 + $0x520] sm:$0xff]
        %v753 = vld [vmem:[%s707 + $0x528] sm:$0xff]
        %v754 = vld [vmem:[%s707 + $0x530] sm:$0xff]
        %v755 = vld [vmem:[%s707 + $0x538] sm:$0xff]
        %v756 = vld [vmem:[%s707 + $0x600] sm:$0xff]
        %v757 = vld [vmem:[%s707 + $0x608] sm:$0xff]
        %v758 = vld [vmem:[%s707 + $0x610] sm:$0xff]
        %v759 = vld [vmem:[%s707 + $0x618] sm:$0xff]
        %v760 = vld [vmem:[%s707 + $0x620] sm:$0xff]
        %v761 = vld [vmem:[%s707 + $0x628] sm:$0xff]
        %v762 = vld [vmem:[%s707 + $0x630] sm:$0xff]
        %v763 = vld [vmem:[%s707 + $0x638] sm:$0xff]
        %v764 = vld [vmem:[%s707 + $0x700] sm:$0xff]
        %v765 = vld [vmem:[%s707 + $0x708] sm:$0xff]
        %v766 = vld [vmem:[%s707 + $0x710] sm:$0xff]
        %v767 = vld [vmem:[%s707 + $0x718] sm:$0xff]
        %v768 = vld [vmem:[%s707 + $0x720] sm:$0xff]
        %v769 = vld [vmem:[%s707 + $0x728] sm:$0xff]
        %v770 = vld [vmem:[%s707 + $0x730] sm:$0xff]
        %v771 = vld [vmem:[%s707 + $0x738] sm:$0xff]
        %v772 = vrot.slane %v708, 4
        %v773 = vadd.f32 %v708, %v772
        %v774 = vrot.slane %v773, 2
        %v775 = vadd.f32 %v773, %v774
        %v776 = vrot.slane %v775, 1
        %v777 = vadd.f32 %v775, %v776
        %v778 = vrot.slane %v709, 4
        %v779 = vadd.f32 %v709, %v778
        %v780 = vrot.slane %v779, 2
        %v781 = vadd.f32 %v779, %v780
        %v782 = vrot.slane %v781, 1
        %v783 = vadd.f32 %v781, %v782
        %v784 = vrot.slane %v710, 4
        %v785 = vadd.f32 %v710, %v784
        %v786 = vrot.slane %v785, 2
        %v787 = vadd.f32 %v785, %v786
        %v788 = vrot.slane %v787, 1
        %v789 = vadd.f32 %v787, %v788
        %v790 = vrot.slane %v711, 4
        %v791 = vadd.f32 %v711, %v790
        %v792 = vrot.slane %v791, 2
        %v793 = vadd.f32 %v791, %v792
        %v794 = vrot.slane %v793, 1
        %v795 = vadd.f32 %v793, %v794
        %v796 = vrot.slane %v712, 4
        %v797 = vadd.f32 %v712, %v796
        %v798 = vrot.slane %v797, 2
        %v799 = vadd.f32 %v797, %v798
        %v800 = vrot.slane %v799, 1
        %v801 = vadd.f32 %v799, %v800
        %v802 = vrot.slane %v713, 4
        %v803 = vadd.f32 %v713, %v802
        %v804 = vrot.slane %v803, 2
        %v805 = vadd.f32 %v803, %v804
        %v806 = vrot.slane %v805, 1
        %v807 = vadd.f32 %v805, %v806
        %v808 = vrot.slane %v714, 4
        %v809 = vadd.f32 %v714, %v808
        %v810 = vrot.slane %v809, 2
        %v811 = vadd.f32 %v809, %v810
        %v812 = vrot.slane %v811, 1
        %v813 = vadd.f32 %v811, %v812
        %v814 = vrot.slane %v715, 4
        %v815 = vadd.f32 %v715, %v814
        %v816 = vrot.slane %v815, 2
        %v817 = vadd.f32 %v815, %v816
        %v818 = vrot.slane %v817, 1
        %v819 = vadd.f32 %v817, %v818
        %v820 = vrot.slane %v716, 4
        %v821 = vadd.f32 %v716, %v820
        %v822 = vrot.slane %v821, 2
        %v823 = vadd.f32 %v821, %v822
        %v824 = vrot.slane %v823, 1
        %v825 = vadd.f32 %v823, %v824
        %v826 = vrot.slane %v717, 4
        %v827 = vadd.f32 %v717, %v826
        %v828 = vrot.slane %v827, 2
        %v829 = vadd.f32 %v827, %v828
        %v830 = vrot.slane %v829, 1
        %v831 = vadd.f32 %v829, %v830
        %v832 = vrot.slane %v718, 4
        %v833 = vadd.f32 %v718, %v832
        %v834 = vrot.slane %v833, 2
        %v835 = vadd.f32 %v833, %v834
        %v836 = vrot.slane %v835, 1
        %v837 = vadd.f32 %v835, %v836
        %v838 = vrot.slane %v719, 4
        %v839 = vadd.f32 %v719, %v838
        %v840 = vrot.slane %v839, 2
        %v841 = vadd.f32 %v839, %v840
        %v842 = vrot.slane %v841, 1
        %v843 = vadd.f32 %v841, %v842
        %v844 = vrot.slane %v720, 4
        %v845 = vadd.f32 %v720, %v844
        %v846 = vrot.slane %v845, 2
        %v847 = vadd.f32 %v845, %v846
        %v848 = vrot.slane %v847, 1
        %v849 = vadd.f32 %v847, %v848
        %v850 = vrot.slane %v721, 4
        %v851 = vadd.f32 %v721, %v850
        %v852 = vrot.slane %v851, 2
        %v853 = vadd.f32 %v851, %v852
        %v854 = vrot.slane %v853, 1
        %v855 = vadd.f32 %v853, %v854
        %v856 = vrot.slane %v722, 4
        %v857 = vadd.f32 %v722, %v856
        %v858 = vrot.slane %v857, 2
        %v859 = vadd.f32 %v857, %v858
        %v860 = vrot.slane %v859, 1
        %v861 = vadd.f32 %v859, %v860
        %v862 = vrot.slane %v723, 4
        %v863 = vadd.f32 %v723, %v862
        %v864 = vrot.slane %v863, 2
        %v865 = vadd.f32 %v863, %v864
        %v866 = vrot.slane %v865, 1
        %v867 = vadd.f32 %v865, %v866
        %v868 = vrot.slane %v724, 4
        %v869 = vadd.f32 %v724, %v868
        %v870 = vrot.slane %v869, 2
        %v871 = vadd.f32 %v869, %v870
        %v872 = vrot.slane %v871, 1
        %v873 = vadd.f32 %v871, %v872
        %v874 = vrot.slane %v725, 4
        %v875 = vadd.f32 %v725, %v874
        %v876 = vrot.slane %v875, 2
        %v877 = vadd.f32 %v875, %v876
        %v878 = vrot.slane %v877, 1
        %v879 = vadd.f32 %v877, %v878
        %v880 = vrot.slane %v726, 4
        %v881 = vadd.f32 %v726, %v880
        %v882 = vrot.slane %v881, 2
        %v883 = vadd.f32 %v881, %v882
        %v884 = vrot.slane %v883, 1
        %v885 = vadd.f32 %v883, %v884
        %v886 = vrot.slane %v727, 4
        %v887 = vadd.f32 %v727, %v886
        %v888 = vrot.slane %v887, 2
        %v889 = vadd.f32 %v887, %v888
        %v890 = vrot.slane %v889, 1
        %v891 = vadd.f32 %v889, %v890
        %v892 = vrot.slane %v728, 4
        %v893 = vadd.f32 %v728, %v892
        %v894 = vrot.slane %v893, 2
        %v895 = vadd.f32 %v893, %v894
        %v896 = vrot.slane %v895, 1
        %v897 = vadd.f32 %v895, %v896
        %v898 = vrot.slane %v729, 4
        %v899 = vadd.f32 %v729, %v898
        %v900 = vrot.slane %v899, 2
        %v901 = vadd.f32 %v899, %v900
        %v902 = vrot.slane %v901, 1
        %v903 = vadd.f32 %v901, %v902
        %v904 = vrot.slane %v730, 4
        %v905 = vadd.f32 %v730, %v904
        %v906 = vrot.slane %v905, 2
        %v907 = vadd.f32 %v905, %v906
        %v908 = vrot.slane %v907, 1
        %v909 = vadd.f32 %v907, %v908
        %v910 = vrot.slane %v731, 4
        %v911 = vadd.f32 %v731, %v910
        %v912 = vrot.slane %v911, 2
        %v913 = vadd.f32 %v911, %v912
        %v914 = vrot.slane %v913, 1
        %v915 = vadd.f32 %v913, %v914
        %v916 = vrot.slane %v732, 4
        %v917 = vadd.f32 %v732, %v916
        %v918 = vrot.slane %v917, 2
        %v919 = vadd.f32 %v917, %v918
        %v920 = vrot.slane %v919, 1
        %v921 = vadd.f32 %v919, %v920
        %v922 = vrot.slane %v733, 4
        %v923 = vadd.f32 %v733, %v922
        %v924 = vrot.slane %v923, 2
        %v925 = vadd.f32 %v923, %v924
        %v926 = vrot.slane %v925, 1
        %v927 = vadd.f32 %v925, %v926
        %v928 = vrot.slane %v734, 4
        %v929 = vadd.f32 %v734, %v928
        %v930 = vrot.slane %v929, 2
        %v931 = vadd.f32 %v929, %v930
        %v932 = vrot.slane %v931, 1
        %v933 = vadd.f32 %v931, %v932
        %v934 = vrot.slane %v735, 4
        %v935 = vadd.f32 %v735, %v934
        %v936 = vrot.slane %v935, 2
        %v937 = vadd.f32 %v935, %v936
        %v938 = vrot.slane %v937, 1
        %v939 = vadd.f32 %v937, %v938
        %v940 = vrot.slane %v736, 4
        %v941 = vadd.f32 %v736, %v940
        %v942 = vrot.slane %v941, 2
        %v943 = vadd.f32 %v941, %v942
        %v944 = vrot.slane %v943, 1
        %v945 = vadd.f32 %v943, %v944
        %v946 = vrot.slane %v737, 4
        %v947 = vadd.f32 %v737, %v946
        %v948 = vrot.slane %v947, 2
        %v949 = vadd.f32 %v947, %v948
        %v950 = vrot.slane %v949, 1
        %v951 = vadd.f32 %v949, %v950
        %v952 = vrot.slane %v738, 4
        %v953 = vadd.f32 %v738, %v952
        %v954 = vrot.slane %v953, 2
        %v955 = vadd.f32 %v953, %v954
        %v956 = vrot.slane %v955, 1
        %v957 = vadd.f32 %v955, %v956
        %v958 = vrot.slane %v739, 4
        %v959 = vadd.f32 %v739, %v958
        %v960 = vrot.slane %v959, 2
        %v961 = vadd.f32 %v959, %v960
        %v962 = vrot.slane %v961, 1
        %v963 = vadd.f32 %v961, %v962
        %v964 = vrot.slane %v740, 4
        %v965 = vadd.f32 %v740, %v964
        %v966 = vrot.slane %v965, 2
        %v967 = vadd.f32 %v965, %v966
        %v968 = vrot.slane %v967, 1
        %v969 = vadd.f32 %v967, %v968
        %v970 = vrot.slane %v741, 4
        %v971 = vadd.f32 %v741, %v970
        %v972 = vrot.slane %v971, 2
        %v973 = vadd.f32 %v971, %v972
        %v974 = vrot.slane %v973, 1
        %v975 = vadd.f32 %v973, %v974
        %v976 = vrot.slane %v742, 4
        %v977 = vadd.f32 %v742, %v976
        %v978 = vrot.slane %v977, 2
        %v979 = vadd.f32 %v977, %v978
        %v980 = vrot.slane %v979, 1
        %v981 = vadd.f32 %v979, %v980
        %v982 = vrot.slane %v743, 4
        %v983 = vadd.f32 %v743, %v982
        %v984 = vrot.slane %v983, 2
        %v985 = vadd.f32 %v983, %v984
        %v986 = vrot.slane %v985, 1
        %v987 = vadd.f32 %v985, %v986
        %v988 = vrot.slane %v744, 4
        %v989 = vadd.f32 %v744, %v988
        %v990 = vrot.slane %v989, 2
        %v991 = vadd.f32 %v989, %v990
        %v992 = vrot.slane %v991, 1
        %v993 = vadd.f32 %v991, %v992
        %v994 = vrot.slane %v745, 4
        %v995 = vadd.f32 %v745, %v994
        %v996 = vrot.slane %v995, 2
        %v997 = vadd.f32 %v995, %v996
        %v998 = vrot.slane %v997, 1
        %v999 = vadd.f32 %v997, %v998
        %v1000 = vrot.slane %v746, 4
        %v1001 = vadd.f32 %v746, %v1000
        %v1002 = vrot.slane %v1001, 2
        %v1003 = vadd.f32 %v1001, %v1002
        %v1004 = vrot.slane %v1003, 1
        %v1005 = vadd.f32 %v1003, %v1004
        %v1006 = vrot.slane %v747, 4
        %v1007 = vadd.f32 %v747, %v1006
        %v1008 = vrot.slane %v1007, 2
        %v1009 = vadd.f32 %v1007, %v1008
        %v1010 = vrot.slane %v1009, 1
        %v1011 = vadd.f32 %v1009, %v1010
        %v1012 = vrot.slane %v748, 4
        %v1013 = vadd.f32 %v748, %v1012
        %v1014 = vrot.slane %v1013, 2
        %v1015 = vadd.f32 %v1013, %v1014
        %v1016 = vrot.slane %v1015, 1
        %v1017 = vadd.f32 %v1015, %v1016
        %v1018 = vrot.slane %v749, 4
        %v1019 = vadd.f32 %v749, %v1018
        %v1020 = vrot.slane %v1019, 2
        %v1021 = vadd.f32 %v1019, %v1020
        %v1022 = vrot.slane %v1021, 1
        %v1023 = vadd.f32 %v1021, %v1022
        %v1024 = vrot.slane %v750, 4
        %v1025 = vadd.f32 %v750, %v1024
        %v1026 = vrot.slane %v1025, 2
        %v1027 = vadd.f32 %v1025, %v1026
        %v1028 = vrot.slane %v1027, 1
        %v1029 = vadd.f32 %v1027, %v1028
        %v1030 = vrot.slane %v751, 4
        %v1031 = vadd.f32 %v751, %v1030
        %v1032 = vrot.slane %v1031, 2
        %v1033 = vadd.f32 %v1031, %v1032
        %v1034 = vrot.slane %v1033, 1
        %v1035 = vadd.f32 %v1033, %v1034
        %v1036 = vrot.slane %v752, 4
        %v1037 = vadd.f32 %v752, %v1036
        %v1038 = vrot.slane %v1037, 2
        %v1039 = vadd.f32 %v1037, %v1038
        %v1040 = vrot.slane %v1039, 1
        %v1041 = vadd.f32 %v1039, %v1040
        %v1042 = vrot.slane %v753, 4
        %v1043 = vadd.f32 %v753, %v1042
        %v1044 = vrot.slane %v1043, 2
        %v1045 = vadd.f32 %v1043, %v1044
        %v1046 = vrot.slane %v1045, 1
        %v1047 = vadd.f32 %v1045, %v1046
        %v1048 = vrot.slane %v754, 4
        %v1049 = vadd.f32 %v754, %v1048
        %v1050 = vrot.slane %v1049, 2
        %v1051 = vadd.f32 %v1049, %v1050
        %v1052 = vrot.slane %v1051, 1
        %v1053 = vadd.f32 %v1051, %v1052
        %v1054 = vrot.slane %v755, 4
        %v1055 = vadd.f32 %v755, %v1054
        %v1056 = vrot.slane %v1055, 2
        %v1057 = vadd.f32 %v1055, %v1056
        %v1058 = vrot.slane %v1057, 1
        %v1059 = vadd.f32 %v1057, %v1058
        %v1060 = vrot.slane %v756, 4
        %v1061 = vadd.f32 %v756, %v1060
        %v1062 = vrot.slane %v1061, 2
        %v1063 = vadd.f32 %v1061, %v1062
        %v1064 = vrot.slane %v1063, 1
        %v1065 = vadd.f32 %v1063, %v1064
        %v1066 = vrot.slane %v757, 4
        %v1067 = vadd.f32 %v757, %v1066
        %v1068 = vrot.slane %v1067, 2
        %v1069 = vadd.f32 %v1067, %v1068
        %v1070 = vrot.slane %v1069, 1
        %v1071 = vadd.f32 %v1069, %v1070
        %v1072 = vrot.slane %v758, 4
        %v1073 = vadd.f32 %v758, %v1072
        %v1074 = vrot.slane %v1073, 2
        %v1075 = vadd.f32 %v1073, %v1074
        %v1076 = vrot.slane %v1075, 1
        %v1077 = vadd.f32 %v1075, %v1076
        %v1078 = vrot.slane %v759, 4
        %v1079 = vadd.f32 %v759, %v1078
        %v1080 = vrot.slane %v1079, 2
        %v1081 = vadd.f32 %v1079, %v1080
        %v1082 = vrot.slane %v1081, 1
        %v1083 = vadd.f32 %v1081, %v1082
        %v1084 = vrot.slane %v760, 4
        %v1085 = vadd.f32 %v760, %v1084
        %v1086 = vrot.slane %v1085, 2
        %v1087 = vadd.f32 %v1085, %v1086
        %v1088 = vrot.slane %v1087, 1
        %v1089 = vadd.f32 %v1087, %v1088
        %v1090 = vrot.slane %v761, 4
        %v1091 = vadd.f32 %v761, %v1090
        %v1092 = vrot.slane %v1091, 2
        %v1093 = vadd.f32 %v1091, %v1092
        %v1094 = vrot.slane %v1093, 1
        %v1095 = vadd.f32 %v1093, %v1094
        %v1096 = vrot.slane %v762, 4
        %v1097 = vadd.f32 %v762, %v1096
        %v1098 = vrot.slane %v1097, 2
        %v1099 = vadd.f32 %v1097, %v1098
        %v1100 = vrot.slane %v1099, 1
        %v1101 = vadd.f32 %v1099, %v1100
        %v1102 = vrot.slane %v763, 4
        %v1103 = vadd.f32 %v763, %v1102
        %v1104 = vrot.slane %v1103, 2
        %v1105 = vadd.f32 %v1103, %v1104
        %v1106 = vrot.slane %v1105, 1
        %v1107 = vadd.f32 %v1105, %v1106
        %v1108 = vrot.slane %v764, 4
        %v1109 = vadd.f32 %v764, %v1108
        %v1110 = vrot.slane %v1109, 2
        %v1111 = vadd.f32 %v1109, %v1110
        %v1112 = vrot.slane %v1111, 1
        %v1113 = vadd.f32 %v1111, %v1112
        %v1114 = vrot.slane %v765, 4
        %v1115 = vadd.f32 %v765, %v1114
        %v1116 = vrot.slane %v1115, 2
        %v1117 = vadd.f32 %v1115, %v1116
        %v1118 = vrot.slane %v1117, 1
        %v1119 = vadd.f32 %v1117, %v1118
        %v1120 = vrot.slane %v766, 4
        %v1121 = vadd.f32 %v766, %v1120
        %v1122 = vrot.slane %v1121, 2
        %v1123 = vadd.f32 %v1121, %v1122
        %v1124 = vrot.slane %v1123, 1
        %v1125 = vadd.f32 %v1123, %v1124
        %v1126 = vrot.slane %v767, 4
        %v1127 = vadd.f32 %v767, %v1126
        %v1128 = vrot.slane %v1127, 2
        %v1129 = vadd.f32 %v1127, %v1128
        %v1130 = vrot.slane %v1129, 1
        %v1131 = vadd.f32 %v1129, %v1130
        %v1132 = vrot.slane %v768, 4
        %v1133 = vadd.f32 %v768, %v1132
        %v1134 = vrot.slane %v1133, 2
        %v1135 = vadd.f32 %v1133, %v1134
        %v1136 = vrot.slane %v1135, 1
        %v1137 = vadd.f32 %v1135, %v1136
        %v1138 = vrot.slane %v769, 4
        %v1139 = vadd.f32 %v769, %v1138
        %v1140 = vrot.slane %v1139, 2
        %v1141 = vadd.f32 %v1139, %v1140
        %v1142 = vrot.slane %v1141, 1
        %v1143 = vadd.f32 %v1141, %v1142
        %v1144 = vrot.slane %v770, 4
        %v1145 = vadd.f32 %v770, %v1144
        %v1146 = vrot.slane %v1145, 2
        %v1147 = vadd.f32 %v1145, %v1146
        %v1148 = vrot.slane %v1147, 1
        %v1149 = vadd.f32 %v1147, %v1148
        %v1150 = vrot.slane %v771, 4
        %v1151 = vadd.f32 %v771, %v1150
        %v1152 = vrot.slane %v1151, 2
        %v1153 = vadd.f32 %v1151, %v1152
        %v1154 = vrot.slane %v1153, 1
        %v1155 = vadd.f32 %v1153, %v1154
        %v1156 = vadd.f32 %v641, %v777
        %v1157 = vadd.f32 %v642, %v783
        %v1158 = vadd.f32 %v643, %v789
        %v1159 = vadd.f32 %v644, %v795
        %v1160 = vadd.f32 %v645, %v801
        %v1161 = vadd.f32 %v646, %v807
        %v1162 = vadd.f32 %v647, %v813
        %v1163 = vadd.f32 %v648, %v819
        %v1164 = vadd.f32 %v649, %v825
        %v1165 = vadd.f32 %v650, %v831
        %v1166 = vadd.f32 %v651, %v837
        %v1167 = vadd.f32 %v652, %v843
        %v1168 = vadd.f32 %v653, %v849
        %v1169 = vadd.f32 %v654, %v855
        %v1170 = vadd.f32 %v655, %v861
        %v1171 = vadd.f32 %v656, %v867
        %v1172 = vadd.f32 %v657, %v873
        %v1173 = vadd.f32 %v658, %v879
        %v1174 = vadd.f32 %v659, %v885
        %v1175 = vadd.f32 %v660, %v891
        %v1176 = vadd.f32 %v661, %v897
        %v1177 = vadd.f32 %v662, %v903
        %v1178 = vadd.f32 %v663, %v909
        %v1179 = vadd.f32 %v664, %v915
        %v1180 = vadd.f32 %v665, %v921
        %v1181 = vadd.f32 %v666, %v927
        %v1182 = vadd.f32 %v667, %v933
        %v1183 = vadd.f32 %v668, %v939
        %v1184 = vadd.f32 %v669, %v945
        %v1185 = vadd.f32 %v670, %v951
        %v1186 = vadd.f32 %v671, %v957
        %v1187 = vadd.f32 %v672, %v963
        %v1188 = vadd.f32 %v673, %v969
        %v1189 = vadd.f32 %v674, %v975
        %v1190 = vadd.f32 %v675, %v981
        %v1191 = vadd.f32 %v676, %v987
        %v1192 = vadd.f32 %v677, %v993
        %v1193 = vadd.f32 %v678, %v999
        %v1194 = vadd.f32 %v679, %v1005
        %v1195 = vadd.f32 %v680, %v1011
        %v1196 = vadd.f32 %v681, %v1017
        %v1197 = vadd.f32 %v682, %v1023
        %v1198 = vadd.f32 %v683, %v1029
        %v1199 = vadd.f32 %v684, %v1035
        %v1200 = vadd.f32 %v685, %v1041
        %v1201 = vadd.f32 %v686, %v1047
        %v1202 = vadd.f32 %v687, %v1053
        %v1203 = vadd.f32 %v688, %v1059
        %v1204 = vadd.f32 %v689, %v1065
        %v1205 = vadd.f32 %v690, %v1071
        %v1206 = vadd.f32 %v691, %v1077
        %v1207 = vadd.f32 %v692, %v1083
        %v1208 = vadd.f32 %v693, %v1089
        %v1209 = vadd.f32 %v694, %v1095
        %v1210 = vadd.f32 %v695, %v1101
        %v1211 = vadd.f32 %v696, %v1107
        %v1212 = vadd.f32 %v697, %v1113
        %v1213 = vadd.f32 %v698, %v1119
        %v1214 = vadd.f32 %v699, %v1125
        %v1215 = vadd.f32 %v700, %v1131
        %v1216 = vadd.f32 %v701, %v1137
        %v1217 = vadd.f32 %v702, %v1143
        %v1218 = vadd.f32 %v703, %v1149
        %v1219 = vadd.f32 %v704, %v1155
        %s1220 = smul.u32 2, 8
        %s1221 = smul.addr %s1220, 8
        %s1222 = scalar_lea.vmem %s147, %s1221 [#allocation3]
        %v1223 = vld [vmem:[%s1222] sm:$0xff]
        %v1224 = vld [vmem:[%s1222 + $0x8] sm:$0xff]
        %v1225 = vld [vmem:[%s1222 + $0x10] sm:$0xff]
        %v1226 = vld [vmem:[%s1222 + $0x18] sm:$0xff]
        %v1227 = vld [vmem:[%s1222 + $0x20] sm:$0xff]
        %v1228 = vld [vmem:[%s1222 + $0x28] sm:$0xff]
        %v1229 = vld [vmem:[%s1222 + $0x30] sm:$0xff]
        %v1230 = vld [vmem:[%s1222 + $0x38] sm:$0xff]
        %v1231 = vld [vmem:[%s1222 + $0x100] sm:$0xff]
        %v1232 = vld [vmem:[%s1222 + $0x108] sm:$0xff]
        %v1233 = vld [vmem:[%s1222 + $0x110] sm:$0xff]
        %v1234 = vld [vmem:[%s1222 + $0x118] sm:$0xff]
        %v1235 = vld [vmem:[%s1222 + $0x120] sm:$0xff]
        %v1236 = vld [vmem:[%s1222 + $0x128] sm:$0xff]
        %v1237 = vld [vmem:[%s1222 + $0x130] sm:$0xff]
        %v1238 = vld [vmem:[%s1222 + $0x138] sm:$0xff]
        %v1239 = vld [vmem:[%s1222 + $0x200] sm:$0xff]
        %v1240 = vld [vmem:[%s1222 + $0x208] sm:$0xff]
        %v1241 = vld [vmem:[%s1222 + $0x210] sm:$0xff]
        %v1242 = vld [vmem:[%s1222 + $0x218] sm:$0xff]
        %v1243 = vld [vmem:[%s1222 + $0x220] sm:$0xff]
        %v1244 = vld [vmem:[%s1222 + $0x228] sm:$0xff]
        %v1245 = vld [vmem:[%s1222 + $0x230] sm:$0xff]
        %v1246 = vld [vmem:[%s1222 + $0x238] sm:$0xff]
        %v1247 = vld [vmem:[%s1222 + $0x300] sm:$0xff]
        %v1248 = vld [vmem:[%s1222 + $0x308] sm:$0xff]
        %v1249 = vld [vmem:[%s1222 + $0x310] sm:$0xff]
        %v1250 = vld [vmem:[%s1222 + $0x318] sm:$0xff]
        %v1251 = vld [vmem:[%s1222 + $0x320] sm:$0xff]
        %v1252 = vld [vmem:[%s1222 + $0x328] sm:$0xff]
        %v1253 = vld [vmem:[%s1222 + $0x330] sm:$0xff]
        %v1254 = vld [vmem:[%s1222 + $0x338] sm:$0xff]
        %v1255 = vld [vmem:[%s1222 + $0x400] sm:$0xff]
        %v1256 = vld [vmem:[%s1222 + $0x408] sm:$0xff]
        %v1257 = vld [vmem:[%s1222 + $0x410] sm:$0xff]
        %v1258 = vld [vmem:[%s1222 + $0x418] sm:$0xff]
        %v1259 = vld [vmem:[%s1222 + $0x420] sm:$0xff]
        %v1260 = vld [vmem:[%s1222 + $0x428] sm:$0xff]
        %v1261 = vld [vmem:[%s1222 + $0x430] sm:$0xff]
        %v1262 = vld [vmem:[%s1222 + $0x438] sm:$0xff]
        %v1263 = vld [vmem:[%s1222 + $0x500] sm:$0xff]
        %v1264 = vld [vmem:[%s1222 + $0x508] sm:$0xff]
        %v1265 = vld [vmem:[%s1222 + $0x510] sm:$0xff]
        %v1266 = vld [vmem:[%s1222 + $0x518] sm:$0xff]
        %v1267 = vld [vmem:[%s1222 + $0x520] sm:$0xff]
        %v1268 = vld [vmem:[%s1222 + $0x528] sm:$0xff]
        %v1269 = vld [vmem:[%s1222 + $0x530] sm:$0xff]
        %v1270 = vld [vmem:[%s1222 + $0x538] sm:$0xff]
        %v1271 = vld [vmem:[%s1222 + $0x600] sm:$0xff]
        %v1272 = vld [vmem:[%s1222 + $0x608] sm:$0xff]
        %v1273 = vld [vmem:[%s1222 + $0x610] sm:$0xff]
        %v1274 = vld [vmem:[%s1222 + $0x618] sm:$0xff]
        %v1275 = vld [vmem:[%s1222 + $0x620] sm:$0xff]
        %v1276 = vld [vmem:[%s1222 + $0x628] sm:$0xff]
        %v1277 = vld [vmem:[%s1222 + $0x630] sm:$0xff]
        %v1278 = vld [vmem:[%s1222 + $0x638] sm:$0xff]
        %v1279 = vld [vmem:[%s1222 + $0x700] sm:$0xff]
        %v1280 = vld [vmem:[%s1222 + $0x708] sm:$0xff]
        %v1281 = vld [vmem:[%s1222 + $0x710] sm:$0xff]
        %v1282 = vld [vmem:[%s1222 + $0x718] sm:$0xff]
        %v1283 = vld [vmem:[%s1222 + $0x720] sm:$0xff]
        %v1284 = vld [vmem:[%s1222 + $0x728] sm:$0xff]
        %v1285 = vld [vmem:[%s1222 + $0x730] sm:$0xff]
        %v1286 = vld [vmem:[%s1222 + $0x738] sm:$0xff]
        %v1287 = vrot.slane %v1223, 4
        %v1288 = vadd.f32 %v1223, %v1287
        %v1289 = vrot.slane %v1288, 2
        %v1290 = vadd.f32 %v1288, %v1289
        %v1291 = vrot.slane %v1290, 1
        %v1292 = vadd.f32 %v1290, %v1291
        %v1293 = vrot.slane %v1224, 4
        %v1294 = vadd.f32 %v1224, %v1293
        %v1295 = vrot.slane %v1294, 2
        %v1296 = vadd.f32 %v1294, %v1295
        %v1297 = vrot.slane %v1296, 1
        %v1298 = vadd.f32 %v1296, %v1297
        %v1299 = vrot.slane %v1225, 4
        %v1300 = vadd.f32 %v1225, %v1299
        %v1301 = vrot.slane %v1300, 2
        %v1302 = vadd.f32 %v1300, %v1301
        %v1303 = vrot.slane %v1302, 1
        %v1304 = vadd.f32 %v1302, %v1303
        %v1305 = vrot.slane %v1226, 4
        %v1306 = vadd.f32 %v1226, %v1305
        %v1307 = vrot.slane %v1306, 2
        %v1308 = vadd.f32 %v1306, %v1307
        %v1309 = vrot.slane %v1308, 1
        %v1310 = vadd.f32 %v1308, %v1309
        %v1311 = vrot.slane %v1227, 4
        %v1312 = vadd.f32 %v1227, %v1311
        %v1313 = vrot.slane %v1312, 2
        %v1314 = vadd.f32 %v1312, %v1313
        %v1315 = vrot.slane %v1314, 1
        %v1316 = vadd.f32 %v1314, %v1315
        %v1317 = vrot.slane %v1228, 4
        %v1318 = vadd.f32 %v1228, %v1317
        %v1319 = vrot.slane %v1318, 2
        %v1320 = vadd.f32 %v1318, %v1319
        %v1321 = vrot.slane %v1320, 1
        %v1322 = vadd.f32 %v1320, %v1321
        %v1323 = vrot.slane %v1229, 4
        %v1324 = vadd.f32 %v1229, %v1323
        %v1325 = vrot.slane %v1324, 2
        %v1326 = vadd.f32 %v1324, %v1325
        %v1327 = vrot.slane %v1326, 1
        %v1328 = vadd.f32 %v1326, %v1327
        %v1329 = vrot.slane %v1230, 4
        %v1330 = vadd.f32 %v1230, %v1329
        %v1331 = vrot.slane %v1330, 2
        %v1332 = vadd.f32 %v1330, %v1331
        %v1333 = vrot.slane %v1332, 1
        %v1334 = vadd.f32 %v1332, %v1333
        %v1335 = vrot.slane %v1231, 4
        %v1336 = vadd.f32 %v1231, %v1335
        %v1337 = vrot.slane %v1336, 2
        %v1338 = vadd.f32 %v1336, %v1337
        %v1339 = vrot.slane %v1338, 1
        %v1340 = vadd.f32 %v1338, %v1339
        %v1341 = vrot.slane %v1232, 4
        %v1342 = vadd.f32 %v1232, %v1341
        %v1343 = vrot.slane %v1342, 2
        %v1344 = vadd.f32 %v1342, %v1343
        %v1345 = vrot.slane %v1344, 1
        %v1346 = vadd.f32 %v1344, %v1345
        %v1347 = vrot.slane %v1233, 4
        %v1348 = vadd.f32 %v1233, %v1347
        %v1349 = vrot.slane %v1348, 2
        %v1350 = vadd.f32 %v1348, %v1349
        %v1351 = vrot.slane %v1350, 1
        %v1352 = vadd.f32 %v1350, %v1351
        %v1353 = vrot.slane %v1234, 4
        %v1354 = vadd.f32 %v1234, %v1353
        %v1355 = vrot.slane %v1354, 2
        %v1356 = vadd.f32 %v1354, %v1355
        %v1357 = vrot.slane %v1356, 1
        %v1358 = vadd.f32 %v1356, %v1357
        %v1359 = vrot.slane %v1235, 4
        %v1360 = vadd.f32 %v1235, %v1359
        %v1361 = vrot.slane %v1360, 2
        %v1362 = vadd.f32 %v1360, %v1361
        %v1363 = vrot.slane %v1362, 1
        %v1364 = vadd.f32 %v1362, %v1363
        %v1365 = vrot.slane %v1236, 4
        %v1366 = vadd.f32 %v1236, %v1365
        %v1367 = vrot.slane %v1366, 2
        %v1368 = vadd.f32 %v1366, %v1367
        %v1369 = vrot.slane %v1368, 1
        %v1370 = vadd.f32 %v1368, %v1369
        %v1371 = vrot.slane %v1237, 4
        %v1372 = vadd.f32 %v1237, %v1371
        %v1373 = vrot.slane %v1372, 2
        %v1374 = vadd.f32 %v1372, %v1373
        %v1375 = vrot.slane %v1374, 1
        %v1376 = vadd.f32 %v1374, %v1375
        %v1377 = vrot.slane %v1238, 4
        %v1378 = vadd.f32 %v1238, %v1377
        %v1379 = vrot.slane %v1378, 2
        %v1380 = vadd.f32 %v1378, %v1379
        %v1381 = vrot.slane %v1380, 1
        %v1382 = vadd.f32 %v1380, %v1381
        %v1383 = vrot.slane %v1239, 4
        %v1384 = vadd.f32 %v1239, %v1383
        %v1385 = vrot.slane %v1384, 2
        %v1386 = vadd.f32 %v1384, %v1385
        %v1387 = vrot.slane %v1386, 1
        %v1388 = vadd.f32 %v1386, %v1387
        %v1389 = vrot.slane %v1240, 4
        %v1390 = vadd.f32 %v1240, %v1389
        %v1391 = vrot.slane %v1390, 2
        %v1392 = vadd.f32 %v1390, %v1391
        %v1393 = vrot.slane %v1392, 1
        %v1394 = vadd.f32 %v1392, %v1393
        %v1395 = vrot.slane %v1241, 4
        %v1396 = vadd.f32 %v1241, %v1395
        %v1397 = vrot.slane %v1396, 2
        %v1398 = vadd.f32 %v1396, %v1397
        %v1399 = vrot.slane %v1398, 1
        %v1400 = vadd.f32 %v1398, %v1399
        %v1401 = vrot.slane %v1242, 4
        %v1402 = vadd.f32 %v1242, %v1401
        %v1403 = vrot.slane %v1402, 2
        %v1404 = vadd.f32 %v1402, %v1403
        %v1405 = vrot.slane %v1404, 1
        %v1406 = vadd.f32 %v1404, %v1405
        %v1407 = vrot.slane %v1243, 4
        %v1408 = vadd.f32 %v1243, %v1407
        %v1409 = vrot.slane %v1408, 2
        %v1410 = vadd.f32 %v1408, %v1409
        %v1411 = vrot.slane %v1410, 1
        %v1412 = vadd.f32 %v1410, %v1411
        %v1413 = vrot.slane %v1244, 4
        %v1414 = vadd.f32 %v1244, %v1413
        %v1415 = vrot.slane %v1414, 2
        %v1416 = vadd.f32 %v1414, %v1415
        %v1417 = vrot.slane %v1416, 1
        %v1418 = vadd.f32 %v1416, %v1417
        %v1419 = vrot.slane %v1245, 4
        %v1420 = vadd.f32 %v1245, %v1419
        %v1421 = vrot.slane %v1420, 2
        %v1422 = vadd.f32 %v1420, %v1421
        %v1423 = vrot.slane %v1422, 1
        %v1424 = vadd.f32 %v1422, %v1423
        %v1425 = vrot.slane %v1246, 4
        %v1426 = vadd.f32 %v1246, %v1425
        %v1427 = vrot.slane %v1426, 2
        %v1428 = vadd.f32 %v1426, %v1427
        %v1429 = vrot.slane %v1428, 1
        %v1430 = vadd.f32 %v1428, %v1429
        %v1431 = vrot.slane %v1247, 4
        %v1432 = vadd.f32 %v1247, %v1431
        %v1433 = vrot.slane %v1432, 2
        %v1434 = vadd.f32 %v1432, %v1433
        %v1435 = vrot.slane %v1434, 1
        %v1436 = vadd.f32 %v1434, %v1435
        %v1437 = vrot.slane %v1248, 4
        %v1438 = vadd.f32 %v1248, %v1437
        %v1439 = vrot.slane %v1438, 2
        %v1440 = vadd.f32 %v1438, %v1439
        %v1441 = vrot.slane %v1440, 1
        %v1442 = vadd.f32 %v1440, %v1441
        %v1443 = vrot.slane %v1249, 4
        %v1444 = vadd.f32 %v1249, %v1443
        %v1445 = vrot.slane %v1444, 2
        %v1446 = vadd.f32 %v1444, %v1445
        %v1447 = vrot.slane %v1446, 1
        %v1448 = vadd.f32 %v1446, %v1447
        %v1449 = vrot.slane %v1250, 4
        %v1450 = vadd.f32 %v1250, %v1449
        %v1451 = vrot.slane %v1450, 2
        %v1452 = vadd.f32 %v1450, %v1451
        %v1453 = vrot.slane %v1452, 1
        %v1454 = vadd.f32 %v1452, %v1453
        %v1455 = vrot.slane %v1251, 4
        %v1456 = vadd.f32 %v1251, %v1455
        %v1457 = vrot.slane %v1456, 2
        %v1458 = vadd.f32 %v1456, %v1457
        %v1459 = vrot.slane %v1458, 1
        %v1460 = vadd.f32 %v1458, %v1459
        %v1461 = vrot.slane %v1252, 4
        %v1462 = vadd.f32 %v1252, %v1461
        %v1463 = vrot.slane %v1462, 2
        %v1464 = vadd.f32 %v1462, %v1463
        %v1465 = vrot.slane %v1464, 1
        %v1466 = vadd.f32 %v1464, %v1465
        %v1467 = vrot.slane %v1253, 4
        %v1468 = vadd.f32 %v1253, %v1467
        %v1469 = vrot.slane %v1468, 2
        %v1470 = vadd.f32 %v1468, %v1469
        %v1471 = vrot.slane %v1470, 1
        %v1472 = vadd.f32 %v1470, %v1471
        %v1473 = vrot.slane %v1254, 4
        %v1474 = vadd.f32 %v1254, %v1473
        %v1475 = vrot.slane %v1474, 2
        %v1476 = vadd.f32 %v1474, %v1475
        %v1477 = vrot.slane %v1476, 1
        %v1478 = vadd.f32 %v1476, %v1477
        %v1479 = vrot.slane %v1255, 4
        %v1480 = vadd.f32 %v1255, %v1479
        %v1481 = vrot.slane %v1480, 2
        %v1482 = vadd.f32 %v1480, %v1481
        %v1483 = vrot.slane %v1482, 1
        %v1484 = vadd.f32 %v1482, %v1483
        %v1485 = vrot.slane %v1256, 4
        %v1486 = vadd.f32 %v1256, %v1485
        %v1487 = vrot.slane %v1486, 2
        %v1488 = vadd.f32 %v1486, %v1487
        %v1489 = vrot.slane %v1488, 1
        %v1490 = vadd.f32 %v1488, %v1489
        %v1491 = vrot.slane %v1257, 4
        %v1492 = vadd.f32 %v1257, %v1491
        %v1493 = vrot.slane %v1492, 2
        %v1494 = vadd.f32 %v1492, %v1493
        %v1495 = vrot.slane %v1494, 1
        %v1496 = vadd.f32 %v1494, %v1495
        %v1497 = vrot.slane %v1258, 4
        %v1498 = vadd.f32 %v1258, %v1497
        %v1499 = vrot.slane %v1498, 2
        %v1500 = vadd.f32 %v1498, %v1499
        %v1501 = vrot.slane %v1500, 1
        %v1502 = vadd.f32 %v1500, %v1501
        %v1503 = vrot.slane %v1259, 4
        %v1504 = vadd.f32 %v1259, %v1503
        %v1505 = vrot.slane %v1504, 2
        %v1506 = vadd.f32 %v1504, %v1505
        %v1507 = vrot.slane %v1506, 1
        %v1508 = vadd.f32 %v1506, %v1507
        %v1509 = vrot.slane %v1260, 4
        %v1510 = vadd.f32 %v1260, %v1509
        %v1511 = vrot.slane %v1510, 2
        %v1512 = vadd.f32 %v1510, %v1511
        %v1513 = vrot.slane %v1512, 1
        %v1514 = vadd.f32 %v1512, %v1513
        %v1515 = vrot.slane %v1261, 4
        %v1516 = vadd.f32 %v1261, %v1515
        %v1517 = vrot.slane %v1516, 2
        %v1518 = vadd.f32 %v1516, %v1517
        %v1519 = vrot.slane %v1518, 1
        %v1520 = vadd.f32 %v1518, %v1519
        %v1521 = vrot.slane %v1262, 4
        %v1522 = vadd.f32 %v1262, %v1521
        %v1523 = vrot.slane %v1522, 2
        %v1524 = vadd.f32 %v1522, %v1523
        %v1525 = vrot.slane %v1524, 1
        %v1526 = vadd.f32 %v1524, %v1525
        %v1527 = vrot.slane %v1263, 4
        %v1528 = vadd.f32 %v1263, %v1527
        %v1529 = vrot.slane %v1528, 2
        %v1530 = vadd.f32 %v1528, %v1529
        %v1531 = vrot.slane %v1530, 1
        %v1532 = vadd.f32 %v1530, %v1531
        %v1533 = vrot.slane %v1264, 4
        %v1534 = vadd.f32 %v1264, %v1533
        %v1535 = vrot.slane %v1534, 2
        %v1536 = vadd.f32 %v1534, %v1535
        %v1537 = vrot.slane %v1536, 1
        %v1538 = vadd.f32 %v1536, %v1537
        %v1539 = vrot.slane %v1265, 4
        %v1540 = vadd.f32 %v1265, %v1539
        %v1541 = vrot.slane %v1540, 2
        %v1542 = vadd.f32 %v1540, %v1541
        %v1543 = vrot.slane %v1542, 1
        %v1544 = vadd.f32 %v1542, %v1543
        %v1545 = vrot.slane %v1266, 4
        %v1546 = vadd.f32 %v1266, %v1545
        %v1547 = vrot.slane %v1546, 2
        %v1548 = vadd.f32 %v1546, %v1547
        %v1549 = vrot.slane %v1548, 1
        %v1550 = vadd.f32 %v1548, %v1549
        %v1551 = vrot.slane %v1267, 4
        %v1552 = vadd.f32 %v1267, %v1551
        %v1553 = vrot.slane %v1552, 2
        %v1554 = vadd.f32 %v1552, %v1553
        %v1555 = vrot.slane %v1554, 1
        %v1556 = vadd.f32 %v1554, %v1555
        %v1557 = vrot.slane %v1268, 4
        %v1558 = vadd.f32 %v1268, %v1557
        %v1559 = vrot.slane %v1558, 2
        %v1560 = vadd.f32 %v1558, %v1559
        %v1561 = vrot.slane %v1560, 1
        %v1562 = vadd.f32 %v1560, %v1561
        %v1563 = vrot.slane %v1269, 4
        %v1564 = vadd.f32 %v1269, %v1563
        %v1565 = vrot.slane %v1564, 2
        %v1566 = vadd.f32 %v1564, %v1565
        %v1567 = vrot.slane %v1566, 1
        %v1568 = vadd.f32 %v1566, %v1567
        %v1569 = vrot.slane %v1270, 4
        %v1570 = vadd.f32 %v1270, %v1569
        %v1571 = vrot.slane %v1570, 2
        %v1572 = vadd.f32 %v1570, %v1571
        %v1573 = vrot.slane %v1572, 1
        %v1574 = vadd.f32 %v1572, %v1573
        %v1575 = vrot.slane %v1271, 4
        %v1576 = vadd.f32 %v1271, %v1575
        %v1577 = vrot.slane %v1576, 2
        %v1578 = vadd.f32 %v1576, %v1577
        %v1579 = vrot.slane %v1578, 1
        %v1580 = vadd.f32 %v1578, %v1579
        %v1581 = vrot.slane %v1272, 4
        %v1582 = vadd.f32 %v1272, %v1581
        %v1583 = vrot.slane %v1582, 2
        %v1584 = vadd.f32 %v1582, %v1583
        %v1585 = vrot.slane %v1584, 1
        %v1586 = vadd.f32 %v1584, %v1585
        %v1587 = vrot.slane %v1273, 4
        %v1588 = vadd.f32 %v1273, %v1587
        %v1589 = vrot.slane %v1588, 2
        %v1590 = vadd.f32 %v1588, %v1589
        %v1591 = vrot.slane %v1590, 1
        %v1592 = vadd.f32 %v1590, %v1591
        %v1593 = vrot.slane %v1274, 4
        %v1594 = vadd.f32 %v1274, %v1593
        %v1595 = vrot.slane %v1594, 2
        %v1596 = vadd.f32 %v1594, %v1595
        %v1597 = vrot.slane %v1596, 1
        %v1598 = vadd.f32 %v1596, %v1597
        %v1599 = vrot.slane %v1275, 4
        %v1600 = vadd.f32 %v1275, %v1599
        %v1601 = vrot.slane %v1600, 2
        %v1602 = vadd.f32 %v1600, %v1601
        %v1603 = vrot.slane %v1602, 1
        %v1604 = vadd.f32 %v1602, %v1603
        %v1605 = vrot.slane %v1276, 4
        %v1606 = vadd.f32 %v1276, %v1605
        %v1607 = vrot.slane %v1606, 2
        %v1608 = vadd.f32 %v1606, %v1607
        %v1609 = vrot.slane %v1608, 1
        %v1610 = vadd.f32 %v1608, %v1609
        %v1611 = vrot.slane %v1277, 4
        %v1612 = vadd.f32 %v1277, %v1611
        %v1613 = vrot.slane %v1612, 2
        %v1614 = vadd.f32 %v1612, %v1613
        %v1615 = vrot.slane %v1614, 1
        %v1616 = vadd.f32 %v1614, %v1615
        %v1617 = vrot.slane %v1278, 4
        %v1618 = vadd.f32 %v1278, %v1617
        %v1619 = vrot.slane %v1618, 2
        %v1620 = vadd.f32 %v1618, %v1619
        %v1621 = vrot.slane %v1620, 1
        %v1622 = vadd.f32 %v1620, %v1621
        %v1623 = vrot.slane %v1279, 4
        %v1624 = vadd.f32 %v1279, %v1623
        %v1625 = vrot.slane %v1624, 2
        %v1626 = vadd.f32 %v1624, %v1625
        %v1627 = vrot.slane %v1626, 1
        %v1628 = vadd.f32 %v1626, %v1627
        %v1629 = vrot.slane %v1280, 4
        %v1630 = vadd.f32 %v1280, %v1629
        %v1631 = vrot.slane %v1630, 2
        %v1632 = vadd.f32 %v1630, %v1631
        %v1633 = vrot.slane %v1632, 1
        %v1634 = vadd.f32 %v1632, %v1633
        %v1635 = vrot.slane %v1281, 4
        %v1636 = vadd.f32 %v1281, %v1635
        %v1637 = vrot.slane %v1636, 2
        %v1638 = vadd.f32 %v1636, %v1637
        %v1639 = vrot.slane %v1638, 1
        %v1640 = vadd.f32 %v1638, %v1639
        %v1641 = vrot.slane %v1282, 4
        %v1642 = vadd.f32 %v1282, %v1641
        %v1643 = vrot.slane %v1642, 2
        %v1644 = vadd.f32 %v1642, %v1643
        %v1645 = vrot.slane %v1644, 1
        %v1646 = vadd.f32 %v1644, %v1645
        %v1647 = vrot.slane %v1283, 4
        %v1648 = vadd.f32 %v1283, %v1647
        %v1649 = vrot.slane %v1648, 2
        %v1650 = vadd.f32 %v1648, %v1649
        %v1651 = vrot.slane %v1650, 1
        %v1652 = vadd.f32 %v1650, %v1651
        %v1653 = vrot.slane %v1284, 4
        %v1654 = vadd.f32 %v1284, %v1653
        %v1655 = vrot.slane %v1654, 2
        %v1656 = vadd.f32 %v1654, %v1655
        %v1657 = vrot.slane %v1656, 1
        %v1658 = vadd.f32 %v1656, %v1657
        %v1659 = vrot.slane %v1285, 4
        %v1660 = vadd.f32 %v1285, %v1659
        %v1661 = vrot.slane %v1660, 2
        %v1662 = vadd.f32 %v1660, %v1661
        %v1663 = vrot.slane %v1662, 1
        %v1664 = vadd.f32 %v1662, %v1663
        %v1665 = vrot.slane %v1286, 4
        %v1666 = vadd.f32 %v1286, %v1665
        %v1667 = vrot.slane %v1666, 2
        %v1668 = vadd.f32 %v1666, %v1667
        %v1669 = vrot.slane %v1668, 1
        %v1670 = vadd.f32 %v1668, %v1669
        %v1671 = vadd.f32 %v1156, %v1292
        %v1672 = vadd.f32 %v1157, %v1298
        %v1673 = vadd.f32 %v1158, %v1304
        %v1674 = vadd.f32 %v1159, %v1310
        %v1675 = vadd.f32 %v1160, %v1316
        %v1676 = vadd.f32 %v1161, %v1322
        %v1677 = vadd.f32 %v1162, %v1328
        %v1678 = vadd.f32 %v1163, %v1334
        %v1679 = vadd.f32 %v1164, %v1340
        %v1680 = vadd.f32 %v1165, %v1346
        %v1681 = vadd.f32 %v1166, %v1352
        %v1682 = vadd.f32 %v1167, %v1358
        %v1683 = vadd.f32 %v1168, %v1364
        %v1684 = vadd.f32 %v1169, %v1370
        %v1685 = vadd.f32 %v1170, %v1376
        %v1686 = vadd.f32 %v1171, %v1382
        %v1687 = vadd.f32 %v1172, %v1388
        %v1688 = vadd.f32 %v1173, %v1394
        %v1689 = vadd.f32 %v1174, %v1400
        %v1690 = vadd.f32 %v1175, %v1406
        %v1691 = vadd.f32 %v1176, %v1412
        %v1692 = vadd.f32 %v1177, %v1418
        %v1693 = vadd.f32 %v1178, %v1424
        %v1694 = vadd.f32 %v1179, %v1430
        %v1695 = vadd.f32 %v1180, %v1436
        %v1696 = vadd.f32 %v1181, %v1442
        %v1697 = vadd.f32 %v1182, %v1448
        %v1698 = vadd.f32 %v1183, %v1454
        %v1699 = vadd.f32 %v1184, %v1460
        %v1700 = vadd.f32 %v1185, %v1466
        %v1701 = vadd.f32 %v1186, %v1472
        %v1702 = vadd.f32 %v1187, %v1478
        %v1703 = vadd.f32 %v1188, %v1484
        %v1704 = vadd.f32 %v1189, %v1490
        %v1705 = vadd.f32 %v1190, %v1496
        %v1706 = vadd.f32 %v1191, %v1502
        %v1707 = vadd.f32 %v1192, %v1508
        %v1708 = vadd.f32 %v1193, %v1514
        %v1709 = vadd.f32 %v1194, %v1520
        %v1710 = vadd.f32 %v1195, %v1526
        %v1711 = vadd.f32 %v1196, %v1532
        %v1712 = vadd.f32 %v1197, %v1538
        %v1713 = vadd.f32 %v1198, %v1544
        %v1714 = vadd.f32 %v1199, %v1550
        %v1715 = vadd.f32 %v1200, %v1556
        %v1716 = vadd.f32 %v1201, %v1562
        %v1717 = vadd.f32 %v1202, %v1568
        %v1718 = vadd.f32 %v1203, %v1574
        %v1719 = vadd.f32 %v1204, %v1580
        %v1720 = vadd.f32 %v1205, %v1586
        %v1721 = vadd.f32 %v1206, %v1592
        %v1722 = vadd.f32 %v1207, %v1598
        %v1723 = vadd.f32 %v1208, %v1604
        %v1724 = vadd.f32 %v1209, %v1610
        %v1725 = vadd.f32 %v1210, %v1616
        %v1726 = vadd.f32 %v1211, %v1622
        %v1727 = vadd.f32 %v1212, %v1628
        %v1728 = vadd.f32 %v1213, %v1634
        %v1729 = vadd.f32 %v1214, %v1640
        %v1730 = vadd.f32 %v1215, %v1646
        %v1731 = vadd.f32 %v1216, %v1652
        %v1732 = vadd.f32 %v1217, %v1658
        %v1733 = vadd.f32 %v1218, %v1664
        %v1734 = vadd.f32 %v1219, %v1670
        %s1735 = smul.u32 3, 8
        %s1736 = smul.addr %s1735, 8
        %s1737 = scalar_lea.vmem %s147, %s1736 [#allocation3]
        %v1738 = vld [vmem:[%s1737] sm:$0xff]
        %v1739 = vld [vmem:[%s1737 + $0x8] sm:$0xff]
        %v1740 = vld [vmem:[%s1737 + $0x10] sm:$0xff]
        %v1741 = vld [vmem:[%s1737 + $0x18] sm:$0xff]
        %v1742 = vld [vmem:[%s1737 + $0x20] sm:$0xff]
        %v1743 = vld [vmem:[%s1737 + $0x28] sm:$0xff]
        %v1744 = vld [vmem:[%s1737 + $0x30] sm:$0xff]
        %v1745 = vld [vmem:[%s1737 + $0x38] sm:$0xff]
        %v1746 = vld [vmem:[%s1737 + $0x100] sm:$0xff]
        %v1747 = vld [vmem:[%s1737 + $0x108] sm:$0xff]
        %v1748 = vld [vmem:[%s1737 + $0x110] sm:$0xff]
        %v1749 = vld [vmem:[%s1737 + $0x118] sm:$0xff]
        %v1750 = vld [vmem:[%s1737 + $0x120] sm:$0xff]
        %v1751 = vld [vmem:[%s1737 + $0x128] sm:$0xff]
        %v1752 = vld [vmem:[%s1737 + $0x130] sm:$0xff]
        %v1753 = vld [vmem:[%s1737 + $0x138] sm:$0xff]
        %v1754 = vld [vmem:[%s1737 + $0x200] sm:$0xff]
        %v1755 = vld [vmem:[%s1737 + $0x208] sm:$0xff]
        %v1756 = vld [vmem:[%s1737 + $0x210] sm:$0xff]
        %v1757 = vld [vmem:[%s1737 + $0x218] sm:$0xff]
        %v1758 = vld [vmem:[%s1737 + $0x220] sm:$0xff]
        %v1759 = vld [vmem:[%s1737 + $0x228] sm:$0xff]
        %v1760 = vld [vmem:[%s1737 + $0x230] sm:$0xff]
        %v1761 = vld [vmem:[%s1737 + $0x238] sm:$0xff]
        %v1762 = vld [vmem:[%s1737 + $0x300] sm:$0xff]
        %v1763 = vld [vmem:[%s1737 + $0x308] sm:$0xff]
        %v1764 = vld [vmem:[%s1737 + $0x310] sm:$0xff]
        %v1765 = vld [vmem:[%s1737 + $0x318] sm:$0xff]
        %v1766 = vld [vmem:[%s1737 + $0x320] sm:$0xff]
        %v1767 = vld [vmem:[%s1737 + $0x328] sm:$0xff]
        %v1768 = vld [vmem:[%s1737 + $0x330] sm:$0xff]
        %v1769 = vld [vmem:[%s1737 + $0x338] sm:$0xff]
        %v1770 = vld [vmem:[%s1737 + $0x400] sm:$0xff]
        %v1771 = vld [vmem:[%s1737 + $0x408] sm:$0xff]
        %v1772 = vld [vmem:[%s1737 + $0x410] sm:$0xff]
        %v1773 = vld [vmem:[%s1737 + $0x418] sm:$0xff]
        %v1774 = vld [vmem:[%s1737 + $0x420] sm:$0xff]
        %v1775 = vld [vmem:[%s1737 + $0x428] sm:$0xff]
        %v1776 = vld [vmem:[%s1737 + $0x430] sm:$0xff]
        %v1777 = vld [vmem:[%s1737 + $0x438] sm:$0xff]
        %v1778 = vld [vmem:[%s1737 + $0x500] sm:$0xff]
        %v1779 = vld [vmem:[%s1737 + $0x508] sm:$0xff]
        %v1780 = vld [vmem:[%s1737 + $0x510] sm:$0xff]
        %v1781 = vld [vmem:[%s1737 + $0x518] sm:$0xff]
        %v1782 = vld [vmem:[%s1737 + $0x520] sm:$0xff]
        %v1783 = vld [vmem:[%s1737 + $0x528] sm:$0xff]
        %v1784 = vld [vmem:[%s1737 + $0x530] sm:$0xff]
        %v1785 = vld [vmem:[%s1737 + $0x538] sm:$0xff]
        %v1786 = vld [vmem:[%s1737 + $0x600] sm:$0xff]
        %v1787 = vld [vmem:[%s1737 + $0x608] sm:$0xff]
        %v1788 = vld [vmem:[%s1737 + $0x610] sm:$0xff]
        %v1789 = vld [vmem:[%s1737 + $0x618] sm:$0xff]
        %v1790 = vld [vmem:[%s1737 + $0x620] sm:$0xff]
        %v1791 = vld [vmem:[%s1737 + $0x628] sm:$0xff]
        %v1792 = vld [vmem:[%s1737 + $0x630] sm:$0xff]
        %v1793 = vld [vmem:[%s1737 + $0x638] sm:$0xff]
        %v1794 = vld [vmem:[%s1737 + $0x700] sm:$0xff]
        %v1795 = vld [vmem:[%s1737 + $0x708] sm:$0xff]
        %v1796 = vld [vmem:[%s1737 + $0x710] sm:$0xff]
        %v1797 = vld [vmem:[%s1737 + $0x718] sm:$0xff]
        %v1798 = vld [vmem:[%s1737 + $0x720] sm:$0xff]
        %v1799 = vld [vmem:[%s1737 + $0x728] sm:$0xff]
        %v1800 = vld [vmem:[%s1737 + $0x730] sm:$0xff]
        %v1801 = vld [vmem:[%s1737 + $0x738] sm:$0xff]
        %v1802 = vrot.slane %v1738, 4
        %v1803 = vadd.f32 %v1738, %v1802
        %v1804 = vrot.slane %v1803, 2
        %v1805 = vadd.f32 %v1803, %v1804
        %v1806 = vrot.slane %v1805, 1
        %v1807 = vadd.f32 %v1805, %v1806
        %v1808 = vrot.slane %v1739, 4
        %v1809 = vadd.f32 %v1739, %v1808
        %v1810 = vrot.slane %v1809, 2
        %v1811 = vadd.f32 %v1809, %v1810
        %v1812 = vrot.slane %v1811, 1
        %v1813 = vadd.f32 %v1811, %v1812
        %v1814 = vrot.slane %v1740, 4
        %v1815 = vadd.f32 %v1740, %v1814
        %v1816 = vrot.slane %v1815, 2
        %v1817 = vadd.f32 %v1815, %v1816
        %v1818 = vrot.slane %v1817, 1
        %v1819 = vadd.f32 %v1817, %v1818
        %v1820 = vrot.slane %v1741, 4
        %v1821 = vadd.f32 %v1741, %v1820
        %v1822 = vrot.slane %v1821, 2
        %v1823 = vadd.f32 %v1821, %v1822
        %v1824 = vrot.slane %v1823, 1
        %v1825 = vadd.f32 %v1823, %v1824
        %v1826 = vrot.slane %v1742, 4
        %v1827 = vadd.f32 %v1742, %v1826
        %v1828 = vrot.slane %v1827, 2
        %v1829 = vadd.f32 %v1827, %v1828
        %v1830 = vrot.slane %v1829, 1
        %v1831 = vadd.f32 %v1829, %v1830
        %v1832 = vrot.slane %v1743, 4
        %v1833 = vadd.f32 %v1743, %v1832
        %v1834 = vrot.slane %v1833, 2
        %v1835 = vadd.f32 %v1833, %v1834
        %v1836 = vrot.slane %v1835, 1
        %v1837 = vadd.f32 %v1835, %v1836
        %v1838 = vrot.slane %v1744, 4
        %v1839 = vadd.f32 %v1744, %v1838
        %v1840 = vrot.slane %v1839, 2
        %v1841 = vadd.f32 %v1839, %v1840
        %v1842 = vrot.slane %v1841, 1
        %v1843 = vadd.f32 %v1841, %v1842
        %v1844 = vrot.slane %v1745, 4
        %v1845 = vadd.f32 %v1745, %v1844
        %v1846 = vrot.slane %v1845, 2
        %v1847 = vadd.f32 %v1845, %v1846
        %v1848 = vrot.slane %v1847, 1
        %v1849 = vadd.f32 %v1847, %v1848
        %v1850 = vrot.slane %v1746, 4
        %v1851 = vadd.f32 %v1746, %v1850
        %v1852 = vrot.slane %v1851, 2
        %v1853 = vadd.f32 %v1851, %v1852
        %v1854 = vrot.slane %v1853, 1
        %v1855 = vadd.f32 %v1853, %v1854
        %v1856 = vrot.slane %v1747, 4
        %v1857 = vadd.f32 %v1747, %v1856
        %v1858 = vrot.slane %v1857, 2
        %v1859 = vadd.f32 %v1857, %v1858
        %v1860 = vrot.slane %v1859, 1
        %v1861 = vadd.f32 %v1859, %v1860
        %v1862 = vrot.slane %v1748, 4
        %v1863 = vadd.f32 %v1748, %v1862
        %v1864 = vrot.slane %v1863, 2
        %v1865 = vadd.f32 %v1863, %v1864
        %v1866 = vrot.slane %v1865, 1
        %v1867 = vadd.f32 %v1865, %v1866
        %v1868 = vrot.slane %v1749, 4
        %v1869 = vadd.f32 %v1749, %v1868
        %v1870 = vrot.slane %v1869, 2
        %v1871 = vadd.f32 %v1869, %v1870
        %v1872 = vrot.slane %v1871, 1
        %v1873 = vadd.f32 %v1871, %v1872
        %v1874 = vrot.slane %v1750, 4
        %v1875 = vadd.f32 %v1750, %v1874
        %v1876 = vrot.slane %v1875, 2
        %v1877 = vadd.f32 %v1875, %v1876
        %v1878 = vrot.slane %v1877, 1
        %v1879 = vadd.f32 %v1877, %v1878
        %v1880 = vrot.slane %v1751, 4
        %v1881 = vadd.f32 %v1751, %v1880
        %v1882 = vrot.slane %v1881, 2
        %v1883 = vadd.f32 %v1881, %v1882
        %v1884 = vrot.slane %v1883, 1
        %v1885 = vadd.f32 %v1883, %v1884
        %v1886 = vrot.slane %v1752, 4
        %v1887 = vadd.f32 %v1752, %v1886
        %v1888 = vrot.slane %v1887, 2
        %v1889 = vadd.f32 %v1887, %v1888
        %v1890 = vrot.slane %v1889, 1
        %v1891 = vadd.f32 %v1889, %v1890
        %v1892 = vrot.slane %v1753, 4
        %v1893 = vadd.f32 %v1753, %v1892
        %v1894 = vrot.slane %v1893, 2
        %v1895 = vadd.f32 %v1893, %v1894
        %v1896 = vrot.slane %v1895, 1
        %v1897 = vadd.f32 %v1895, %v1896
        %v1898 = vrot.slane %v1754, 4
        %v1899 = vadd.f32 %v1754, %v1898
        %v1900 = vrot.slane %v1899, 2
        %v1901 = vadd.f32 %v1899, %v1900
        %v1902 = vrot.slane %v1901, 1
        %v1903 = vadd.f32 %v1901, %v1902
        %v1904 = vrot.slane %v1755, 4
        %v1905 = vadd.f32 %v1755, %v1904
        %v1906 = vrot.slane %v1905, 2
        %v1907 = vadd.f32 %v1905, %v1906
        %v1908 = vrot.slane %v1907, 1
        %v1909 = vadd.f32 %v1907, %v1908
        %v1910 = vrot.slane %v1756, 4
        %v1911 = vadd.f32 %v1756, %v1910
        %v1912 = vrot.slane %v1911, 2
        %v1913 = vadd.f32 %v1911, %v1912
        %v1914 = vrot.slane %v1913, 1
        %v1915 = vadd.f32 %v1913, %v1914
        %v1916 = vrot.slane %v1757, 4
        %v1917 = vadd.f32 %v1757, %v1916
        %v1918 = vrot.slane %v1917, 2
        %v1919 = vadd.f32 %v1917, %v1918
        %v1920 = vrot.slane %v1919, 1
        %v1921 = vadd.f32 %v1919, %v1920
        %v1922 = vrot.slane %v1758, 4
        %v1923 = vadd.f32 %v1758, %v1922
        %v1924 = vrot.slane %v1923, 2
        %v1925 = vadd.f32 %v1923, %v1924
        %v1926 = vrot.slane %v1925, 1
        %v1927 = vadd.f32 %v1925, %v1926
        %v1928 = vrot.slane %v1759, 4
        %v1929 = vadd.f32 %v1759, %v1928
        %v1930 = vrot.slane %v1929, 2
        %v1931 = vadd.f32 %v1929, %v1930
        %v1932 = vrot.slane %v1931, 1
        %v1933 = vadd.f32 %v1931, %v1932
        %v1934 = vrot.slane %v1760, 4
        %v1935 = vadd.f32 %v1760, %v1934
        %v1936 = vrot.slane %v1935, 2
        %v1937 = vadd.f32 %v1935, %v1936
        %v1938 = vrot.slane %v1937, 1
        %v1939 = vadd.f32 %v1937, %v1938
        %v1940 = vrot.slane %v1761, 4
        %v1941 = vadd.f32 %v1761, %v1940
        %v1942 = vrot.slane %v1941, 2
        %v1943 = vadd.f32 %v1941, %v1942
        %v1944 = vrot.slane %v1943, 1
        %v1945 = vadd.f32 %v1943, %v1944
        %v1946 = vrot.slane %v1762, 4
        %v1947 = vadd.f32 %v1762, %v1946
        %v1948 = vrot.slane %v1947, 2
        %v1949 = vadd.f32 %v1947, %v1948
        %v1950 = vrot.slane %v1949, 1
        %v1951 = vadd.f32 %v1949, %v1950
        %v1952 = vrot.slane %v1763, 4
        %v1953 = vadd.f32 %v1763, %v1952
        %v1954 = vrot.slane %v1953, 2
        %v1955 = vadd.f32 %v1953, %v1954
        %v1956 = vrot.slane %v1955, 1
        %v1957 = vadd.f32 %v1955, %v1956
        %v1958 = vrot.slane %v1764, 4
        %v1959 = vadd.f32 %v1764, %v1958
        %v1960 = vrot.slane %v1959, 2
        %v1961 = vadd.f32 %v1959, %v1960
        %v1962 = vrot.slane %v1961, 1
        %v1963 = vadd.f32 %v1961, %v1962
        %v1964 = vrot.slane %v1765, 4
        %v1965 = vadd.f32 %v1765, %v1964
        %v1966 = vrot.slane %v1965, 2
        %v1967 = vadd.f32 %v1965, %v1966
        %v1968 = vrot.slane %v1967, 1
        %v1969 = vadd.f32 %v1967, %v1968
        %v1970 = vrot.slane %v1766, 4
        %v1971 = vadd.f32 %v1766, %v1970
        %v1972 = vrot.slane %v1971, 2
        %v1973 = vadd.f32 %v1971, %v1972
        %v1974 = vrot.slane %v1973, 1
        %v1975 = vadd.f32 %v1973, %v1974
        %v1976 = vrot.slane %v1767, 4
        %v1977 = vadd.f32 %v1767, %v1976
        %v1978 = vrot.slane %v1977, 2
        %v1979 = vadd.f32 %v1977, %v1978
        %v1980 = vrot.slane %v1979, 1
        %v1981 = vadd.f32 %v1979, %v1980
        %v1982 = vrot.slane %v1768, 4
        %v1983 = vadd.f32 %v1768, %v1982
        %v1984 = vrot.slane %v1983, 2
        %v1985 = vadd.f32 %v1983, %v1984
        %v1986 = vrot.slane %v1985, 1
        %v1987 = vadd.f32 %v1985, %v1986
        %v1988 = vrot.slane %v1769, 4
        %v1989 = vadd.f32 %v1769, %v1988
        %v1990 = vrot.slane %v1989, 2
        %v1991 = vadd.f32 %v1989, %v1990
        %v1992 = vrot.slane %v1991, 1
        %v1993 = vadd.f32 %v1991, %v1992
        %v1994 = vrot.slane %v1770, 4
        %v1995 = vadd.f32 %v1770, %v1994
        %v1996 = vrot.slane %v1995, 2
        %v1997 = vadd.f32 %v1995, %v1996
        %v1998 = vrot.slane %v1997, 1
        %v1999 = vadd.f32 %v1997, %v1998
        %v2000 = vrot.slane %v1771, 4
        %v2001 = vadd.f32 %v1771, %v2000
        %v2002 = vrot.slane %v2001, 2
        %v2003 = vadd.f32 %v2001, %v2002
        %v2004 = vrot.slane %v2003, 1
        %v2005 = vadd.f32 %v2003, %v2004
        %v2006 = vrot.slane %v1772, 4
        %v2007 = vadd.f32 %v1772, %v2006
        %v2008 = vrot.slane %v2007, 2
        %v2009 = vadd.f32 %v2007, %v2008
        %v2010 = vrot.slane %v2009, 1
        %v2011 = vadd.f32 %v2009, %v2010
        %v2012 = vrot.slane %v1773, 4
        %v2013 = vadd.f32 %v1773, %v2012
        %v2014 = vrot.slane %v2013, 2
        %v2015 = vadd.f32 %v2013, %v2014
        %v2016 = vrot.slane %v2015, 1
        %v2017 = vadd.f32 %v2015, %v2016
        %v2018 = vrot.slane %v1774, 4
        %v2019 = vadd.f32 %v1774, %v2018
        %v2020 = vrot.slane %v2019, 2
        %v2021 = vadd.f32 %v2019, %v2020
        %v2022 = vrot.slane %v2021, 1
        %v2023 = vadd.f32 %v2021, %v2022
        %v2024 = vrot.slane %v1775, 4
        %v2025 = vadd.f32 %v1775, %v2024
        %v2026 = vrot.slane %v2025, 2
        %v2027 = vadd.f32 %v2025, %v2026
        %v2028 = vrot.slane %v2027, 1
        %v2029 = vadd.f32 %v2027, %v2028
        %v2030 = vrot.slane %v1776, 4
        %v2031 = vadd.f32 %v1776, %v2030
        %v2032 = vrot.slane %v2031, 2
        %v2033 = vadd.f32 %v2031, %v2032
        %v2034 = vrot.slane %v2033, 1
        %v2035 = vadd.f32 %v2033, %v2034
        %v2036 = vrot.slane %v1777, 4
        %v2037 = vadd.f32 %v1777, %v2036
        %v2038 = vrot.slane %v2037, 2
        %v2039 = vadd.f32 %v2037, %v2038
        %v2040 = vrot.slane %v2039, 1
        %v2041 = vadd.f32 %v2039, %v2040
        %v2042 = vrot.slane %v1778, 4
        %v2043 = vadd.f32 %v1778, %v2042
        %v2044 = vrot.slane %v2043, 2
        %v2045 = vadd.f32 %v2043, %v2044
        %v2046 = vrot.slane %v2045, 1
        %v2047 = vadd.f32 %v2045, %v2046
        %v2048 = vrot.slane %v1779, 4
        %v2049 = vadd.f32 %v1779, %v2048
        %v2050 = vrot.slane %v2049, 2
        %v2051 = vadd.f32 %v2049, %v2050
        %v2052 = vrot.slane %v2051, 1
        %v2053 = vadd.f32 %v2051, %v2052
        %v2054 = vrot.slane %v1780, 4
        %v2055 = vadd.f32 %v1780, %v2054
        %v2056 = vrot.slane %v2055, 2
        %v2057 = vadd.f32 %v2055, %v2056
        %v2058 = vrot.slane %v2057, 1
        %v2059 = vadd.f32 %v2057, %v2058
        %v2060 = vrot.slane %v1781, 4
        %v2061 = vadd.f32 %v1781, %v2060
        %v2062 = vrot.slane %v2061, 2
        %v2063 = vadd.f32 %v2061, %v2062
        %v2064 = vrot.slane %v2063, 1
        %v2065 = vadd.f32 %v2063, %v2064
        %v2066 = vrot.slane %v1782, 4
        %v2067 = vadd.f32 %v1782, %v2066
        %v2068 = vrot.slane %v2067, 2
        %v2069 = vadd.f32 %v2067, %v2068
        %v2070 = vrot.slane %v2069, 1
        %v2071 = vadd.f32 %v2069, %v2070
        %v2072 = vrot.slane %v1783, 4
        %v2073 = vadd.f32 %v1783, %v2072
        %v2074 = vrot.slane %v2073, 2
        %v2075 = vadd.f32 %v2073, %v2074
        %v2076 = vrot.slane %v2075, 1
        %v2077 = vadd.f32 %v2075, %v2076
        %v2078 = vrot.slane %v1784, 4
        %v2079 = vadd.f32 %v1784, %v2078
        %v2080 = vrot.slane %v2079, 2
        %v2081 = vadd.f32 %v2079, %v2080
        %v2082 = vrot.slane %v2081, 1
        %v2083 = vadd.f32 %v2081, %v2082
        %v2084 = vrot.slane %v1785, 4
        %v2085 = vadd.f32 %v1785, %v2084
        %v2086 = vrot.slane %v2085, 2
        %v2087 = vadd.f32 %v2085, %v2086
        %v2088 = vrot.slane %v2087, 1
        %v2089 = vadd.f32 %v2087, %v2088
        %v2090 = vrot.slane %v1786, 4
        %v2091 = vadd.f32 %v1786, %v2090
        %v2092 = vrot.slane %v2091, 2
        %v2093 = vadd.f32 %v2091, %v2092
        %v2094 = vrot.slane %v2093, 1
        %v2095 = vadd.f32 %v2093, %v2094
        %v2096 = vrot.slane %v1787, 4
        %v2097 = vadd.f32 %v1787, %v2096
        %v2098 = vrot.slane %v2097, 2
        %v2099 = vadd.f32 %v2097, %v2098
        %v2100 = vrot.slane %v2099, 1
        %v2101 = vadd.f32 %v2099, %v2100
        %v2102 = vrot.slane %v1788, 4
        %v2103 = vadd.f32 %v1788, %v2102
        %v2104 = vrot.slane %v2103, 2
        %v2105 = vadd.f32 %v2103, %v2104
        %v2106 = vrot.slane %v2105, 1
        %v2107 = vadd.f32 %v2105, %v2106
        %v2108 = vrot.slane %v1789, 4
        %v2109 = vadd.f32 %v1789, %v2108
        %v2110 = vrot.slane %v2109, 2
        %v2111 = vadd.f32 %v2109, %v2110
        %v2112 = vrot.slane %v2111, 1
        %v2113 = vadd.f32 %v2111, %v2112
        %v2114 = vrot.slane %v1790, 4
        %v2115 = vadd.f32 %v1790, %v2114
        %v2116 = vrot.slane %v2115, 2
        %v2117 = vadd.f32 %v2115, %v2116
        %v2118 = vrot.slane %v2117, 1
        %v2119 = vadd.f32 %v2117, %v2118
        %v2120 = vrot.slane %v1791, 4
        %v2121 = vadd.f32 %v1791, %v2120
        %v2122 = vrot.slane %v2121, 2
        %v2123 = vadd.f32 %v2121, %v2122
        %v2124 = vrot.slane %v2123, 1
        %v2125 = vadd.f32 %v2123, %v2124
        %v2126 = vrot.slane %v1792, 4
        %v2127 = vadd.f32 %v1792, %v2126
        %v2128 = vrot.slane %v2127, 2
        %v2129 = vadd.f32 %v2127, %v2128
        %v2130 = vrot.slane %v2129, 1
        %v2131 = vadd.f32 %v2129, %v2130
        %v2132 = vrot.slane %v1793, 4
        %v2133 = vadd.f32 %v1793, %v2132
        %v2134 = vrot.slane %v2133, 2
        %v2135 = vadd.f32 %v2133, %v2134
        %v2136 = vrot.slane %v2135, 1
        %v2137 = vadd.f32 %v2135, %v2136
        %v2138 = vrot.slane %v1794, 4
        %v2139 = vadd.f32 %v1794, %v2138
        %v2140 = vrot.slane %v2139, 2
        %v2141 = vadd.f32 %v2139, %v2140
        %v2142 = vrot.slane %v2141, 1
        %v2143 = vadd.f32 %v2141, %v2142
        %v2144 = vrot.slane %v1795, 4
        %v2145 = vadd.f32 %v1795, %v2144
        %v2146 = vrot.slane %v2145, 2
        %v2147 = vadd.f32 %v2145, %v2146
        %v2148 = vrot.slane %v2147, 1
        %v2149 = vadd.f32 %v2147, %v2148
        %v2150 = vrot.slane %v1796, 4
        %v2151 = vadd.f32 %v1796, %v2150
        %v2152 = vrot.slane %v2151, 2
        %v2153 = vadd.f32 %v2151, %v2152
        %v2154 = vrot.slane %v2153, 1
        %v2155 = vadd.f32 %v2153, %v2154
        %v2156 = vrot.slane %v1797, 4
        %v2157 = vadd.f32 %v1797, %v2156
        %v2158 = vrot.slane %v2157, 2
        %v2159 = vadd.f32 %v2157, %v2158
        %v2160 = vrot.slane %v2159, 1
        %v2161 = vadd.f32 %v2159, %v2160
        %v2162 = vrot.slane %v1798, 4
        %v2163 = vadd.f32 %v1798, %v2162
        %v2164 = vrot.slane %v2163, 2
        %v2165 = vadd.f32 %v2163, %v2164
        %v2166 = vrot.slane %v2165, 1
        %v2167 = vadd.f32 %v2165, %v2166
        %v2168 = vrot.slane %v1799, 4
        %v2169 = vadd.f32 %v1799, %v2168
        %v2170 = vrot.slane %v2169, 2
        %v2171 = vadd.f32 %v2169, %v2170
        %v2172 = vrot.slane %v2171, 1
        %v2173 = vadd.f32 %v2171, %v2172
        %v2174 = vrot.slane %v1800, 4
        %v2175 = vadd.f32 %v1800, %v2174
        %v2176 = vrot.slane %v2175, 2
        %v2177 = vadd.f32 %v2175, %v2176
        %v2178 = vrot.slane %v2177, 1
        %v2179 = vadd.f32 %v2177, %v2178
        %v2180 = vrot.slane %v1801, 4
        %v2181 = vadd.f32 %v1801, %v2180
        %v2182 = vrot.slane %v2181, 2
        %v2183 = vadd.f32 %v2181, %v2182
        %v2184 = vrot.slane %v2183, 1
        %v2185 = vadd.f32 %v2183, %v2184
        %v2186 = vadd.f32 %v1671, %v1807
        %v2187 = vadd.f32 %v1672, %v1813
        %v2188 = vadd.f32 %v1673, %v1819
        %v2189 = vadd.f32 %v1674, %v1825
        %v2190 = vadd.f32 %v1675, %v1831
        %v2191 = vadd.f32 %v1676, %v1837
        %v2192 = vadd.f32 %v1677, %v1843
        %v2193 = vadd.f32 %v1678, %v1849
        %v2194 = vadd.f32 %v1679, %v1855
        %v2195 = vadd.f32 %v1680, %v1861
        %v2196 = vadd.f32 %v1681, %v1867
        %v2197 = vadd.f32 %v1682, %v1873
        %v2198 = vadd.f32 %v1683, %v1879
        %v2199 = vadd.f32 %v1684, %v1885
        %v2200 = vadd.f32 %v1685, %v1891
        %v2201 = vadd.f32 %v1686, %v1897
        %v2202 = vadd.f32 %v1687, %v1903
        %v2203 = vadd.f32 %v1688, %v1909
        %v2204 = vadd.f32 %v1689, %v1915
        %v2205 = vadd.f32 %v1690, %v1921
        %v2206 = vadd.f32 %v1691, %v1927
        %v2207 = vadd.f32 %v1692, %v1933
        %v2208 = vadd.f32 %v1693, %v1939
        %v2209 = vadd.f32 %v1694, %v1945
        %v2210 = vadd.f32 %v1695, %v1951
        %v2211 = vadd.f32 %v1696, %v1957
        %v2212 = vadd.f32 %v1697, %v1963
        %v2213 = vadd.f32 %v1698, %v1969
        %v2214 = vadd.f32 %v1699, %v1975
        %v2215 = vadd.f32 %v1700, %v1981
        %v2216 = vadd.f32 %v1701, %v1987
        %v2217 = vadd.f32 %v1702, %v1993
        %v2218 = vadd.f32 %v1703, %v1999
        %v2219 = vadd.f32 %v1704, %v2005
        %v2220 = vadd.f32 %v1705, %v2011
        %v2221 = vadd.f32 %v1706, %v2017
        %v2222 = vadd.f32 %v1707, %v2023
        %v2223 = vadd.f32 %v1708, %v2029
        %v2224 = vadd.f32 %v1709, %v2035
        %v2225 = vadd.f32 %v1710, %v2041
        %v2226 = vadd.f32 %v1711, %v2047
        %v2227 = vadd.f32 %v1712, %v2053
        %v2228 = vadd.f32 %v1713, %v2059
        %v2229 = vadd.f32 %v1714, %v2065
        %v2230 = vadd.f32 %v1715, %v2071
        %v2231 = vadd.f32 %v1716, %v2077
        %v2232 = vadd.f32 %v1717, %v2083
        %v2233 = vadd.f32 %v1718, %v2089
        %v2234 = vadd.f32 %v1719, %v2095
        %v2235 = vadd.f32 %v1720, %v2101
        %v2236 = vadd.f32 %v1721, %v2107
        %v2237 = vadd.f32 %v1722, %v2113
        %v2238 = vadd.f32 %v1723, %v2119
        %v2239 = vadd.f32 %v1724, %v2125
        %v2240 = vadd.f32 %v1725, %v2131
        %v2241 = vadd.f32 %v1726, %v2137
        %v2242 = vadd.f32 %v1727, %v2143
        %v2243 = vadd.f32 %v1728, %v2149
        %v2244 = vadd.f32 %v1729, %v2155
        %v2245 = vadd.f32 %v1730, %v2161
        %v2246 = vadd.f32 %v1731, %v2167
        %v2247 = vadd.f32 %v1732, %v2173
        %v2248 = vadd.f32 %v1733, %v2179
        %v2249 = vadd.f32 %v1734, %v2185
        %vm2314 = vcmask 1041409
        %v2315 = vsel %vm2314, %v2194, %v2186
        %vm2316 = vcmask 1042434
        %v2317 = vsel %vm2316, %v2202, %v2315
        %vm2318 = vcmask 1043459
        %v2319 = vsel %vm2318, %v2210, %v2317
        %vm2320 = vcmask 1044484
        %v2321 = vsel %vm2320, %v2218, %v2319
        %vm2322 = vcmask 1045509
        %v2323 = vsel %vm2322, %v2226, %v2321
        %vm2324 = vcmask 1046534
        %v2325 = vsel %vm2324, %v2234, %v2323
        %vm2326 = vcmask 1047559
        %v2327 = vsel %vm2326, %v2242, %v2325
        %v2328 = vsel %vm2314, %v2195, %v2187
        %v2329 = vsel %vm2316, %v2203, %v2328
        %v2330 = vsel %vm2318, %v2211, %v2329
        %v2331 = vsel %vm2320, %v2219, %v2330
        %v2332 = vsel %vm2322, %v2227, %v2331
        %v2333 = vsel %vm2324, %v2235, %v2332
        %v2334 = vsel %vm2326, %v2243, %v2333
        %v2335 = vsel %vm2314, %v2196, %v2188
        %v2336 = vsel %vm2316, %v2204, %v2335
        %v2337 = vsel %vm2318, %v2212, %v2336
        %v2338 = vsel %vm2320, %v2220, %v2337
        %v2339 = vsel %vm2322, %v2228, %v2338
        %v2340 = vsel %vm2324, %v2236, %v2339
        %v2341 = vsel %vm2326, %v2244, %v2340
        %v2342 = vsel %vm2314, %v2197, %v2189
        %v2343 = vsel %vm2316, %v2205, %v2342
        %v2344 = vsel %vm2318, %v2213, %v2343
        %v2345 = vsel %vm2320, %v2221, %v2344
        %v2346 = vsel %vm2322, %v2229, %v2345
        %v2347 = vsel %vm2324, %v2237, %v2346
        %v2348 = vsel %vm2326, %v2245, %v2347
        %v2349 = vsel %vm2314, %v2198, %v2190
        %v2350 = vsel %vm2316, %v2206, %v2349
        %v2351 = vsel %vm2318, %v2214, %v2350
        %v2352 = vsel %vm2320, %v2222, %v2351
        %v2353 = vsel %vm2322, %v2230, %v2352
        %v2354 = vsel %vm2324, %v2238, %v2353
        %v2355 = vsel %vm2326, %v2246, %v2354
        %v2356 = vsel %vm2314, %v2199, %v2191
        %v2357 = vsel %vm2316, %v2207, %v2356
        %v2358 = vsel %vm2318, %v2215, %v2357
        %v2359 = vsel %vm2320, %v2223, %v2358
        %v2360 = vsel %vm2322, %v2231, %v2359
        %v2361 = vsel %vm2324, %v2239, %v2360
        %v2362 = vsel %vm2326, %v2247, %v2361
        %v2363 = vsel %vm2314, %v2200, %v2192
        %v2364 = vsel %vm2316, %v2208, %v2363
        %v2365 = vsel %vm2318, %v2216, %v2364
        %v2366 = vsel %vm2320, %v2224, %v2365
        %v2367 = vsel %vm2322, %v2232, %v2366
        %v2368 = vsel %vm2324, %v2240, %v2367
        %v2369 = vsel %vm2326, %v2248, %v2368
        %v2370 = vsel %vm2314, %v2201, %v2193
        %v2371 = vsel %vm2316, %v2209, %v2370
        %v2372 = vsel %vm2318, %v2217, %v2371
        %v2373 = vsel %vm2320, %v2225, %v2372
        %v2374 = vsel %vm2322, %v2233, %v2373
        %v2375 = vsel %vm2324, %v2241, %v2374
        %v2376 = vsel %vm2326, %v2249, %v2375
        %v2385 = vadd.f32 %v182, %v2327
        %v2386 = vadd.f32 %v183, %v2334
        %v2387 = vadd.f32 %v184, %v2341
        %v2388 = vadd.f32 %v185, %v2348
        %v2389 = vadd.f32 %v186, %v2355
        %v2390 = vadd.f32 %v187, %v2362
        %v2391 = vadd.f32 %v188, %v2369
        %v2392 = vadd.f32 %v189, %v2376
        %2393 = vst [vmem:[#allocation2] sm:$0xff] %v2385
        %2394 = vst [vmem:[#allocation2 + $0x8] sm:$0xff] %v2386
        %2395 = vst [vmem:[#allocation2 + $0x10] sm:$0xff] %v2387
        %2396 = vst [vmem:[#allocation2 + $0x18] sm:$0xff] %v2388
        %2397 = vst [vmem:[#allocation2 + $0x20] sm:$0xff] %v2389
        %2398 = vst [vmem:[#allocation2 + $0x28] sm:$0xff] %v2390
        %2399 = vst [vmem:[#allocation2 + $0x30] sm:$0xff] %v2391
        %2400 = vst [vmem:[#allocation2 + $0x38] sm:$0xff] %v2392
        // Predicated region
        $region33: #{tpu_custom_call.1} parent=23 // pred_check
          %p2401 = pneg %p170
        $region34: #{tpu_custom_call.1} parent=23 // pred_check_branch
          %2403 = sbr.rel (%p2401) target = $region36
        $region35: #{tpu_custom_call.1} parent=23 // pred_region
          %v2404 = vld [vmem:[#allocation2] sm:$0xff]
          %v2405 = vld [vmem:[#allocation2 + $0x8] sm:$0xff]
          %v2406 = vld [vmem:[#allocation2 + $0x10] sm:$0xff]
          %v2407 = vld [vmem:[#allocation2 + $0x18] sm:$0xff]
          %v2408 = vld [vmem:[#allocation2 + $0x20] sm:$0xff]
          %v2409 = vld [vmem:[#allocation2 + $0x28] sm:$0xff]
          %v2410 = vld [vmem:[#allocation2 + $0x30] sm:$0xff]
          %v2411 = vld [vmem:[#allocation2 + $0x38] sm:$0xff]
          %v2412 = vmul.f32 %v2404, 0.03125
          %v2413 = vmul.f32 %v2405, 0.03125
          %v2414 = vmul.f32 %v2406, 0.03125
          %v2415 = vmul.f32 %v2407, 0.03125
          %v2416 = vmul.f32 %v2408, 0.03125
          %v2417 = vmul.f32 %v2409, 0.03125
          %v2418 = vmul.f32 %v2410, 0.03125
          %v2419 = vmul.f32 %v2411, 0.03125
          %2420 = vst [vmem:[%s165] sm:$0xff] %v2412
          %2421 = vst [vmem:[%s165 + $0x8] sm:$0xff] %v2413
          %2422 = vst [vmem:[%s165 + $0x10] sm:$0xff] %v2414
          %2423 = vst [vmem:[%s165 + $0x18] sm:$0xff] %v2415
          %2424 = vst [vmem:[%s165 + $0x20] sm:$0xff] %v2416
          %2425 = vst [vmem:[%s165 + $0x28] sm:$0xff] %v2417
          %2426 = vst [vmem:[%s165 + $0x30] sm:$0xff] %v2418
          %2427 = vst [vmem:[%s165 + $0x38] sm:$0xff] %v2419
        $region36: #{tpu_custom_call.1} parent=23 // pred_fallthru
          _
        %s2428 = sand.u32 %s77, 1
        %s2429 = scalar_lea.sflag [#allocation5], %s2428
        %s2430 = sand.u32 %s77, 1
        %s2431 = smul.addr %s2430, 64
        %s2432 = scalar_lea.vmem [#allocation6], %s2431
        // Predicated region
        $region37: #{tpu_custom_call.1} parent=23 // pred_check
          %p2433 = pneg %p87
        $region38: #{tpu_custom_call.1} parent=23 // pred_check_branch
          %2435 = sbr.rel (%p2433) target = $region40
        $region39: #{tpu_custom_call.1} parent=23 // pred_region
          %s2436 = smul.u32 8, %s24
          %s2438 = ssub.s32 1024, 1024
          %2439 = vsyncadd %s2429, %s2438
          %s2440 = smul.addr %s23, 8
          %s2441 = sadd.s32 %s2436, %s2440
          %s2442 = smul.addr %s2441, 128
          %s2443 = scalar_lea.hbm %s1, %s2442
          %s2445 = sshll.u32 %s2432, 4
          %s2446 = int_to_ptr.vmem [resolvable:$true] %s2445
          %2448 = dma.vmem_to_hbm [thread:$0]  %s2446, 1024, %s2443, %s2429
        $region40: #{tpu_custom_call.1} parent=23 // pred_fallthru
          _
      $region24: #{tpu_custom_call.1} parent=5 // pred_fallthru
        _
      %p2449 = scmp.le.s32.totalorder 2, %s13
      // Predicated region
      $region41: #{tpu_custom_call.1} parent=5 // pred_check
        %p2450 = pneg %p2449
      $region42: #{tpu_custom_call.1} parent=5 // pred_check_branch
        %2452 = sbr.rel (%p2450) target = $region44
      $region43: #{tpu_custom_call.1} parent=5 // pred_region
        %s2453 = ssub.s32 %s13, 2
        // Predicated region
        $region45: #{tpu_custom_call.1} parent=43 // pred_check
          %p2454 = pneg %p93
        $region46: #{tpu_custom_call.1} parent=43 // pred_check_branch
          %2456 = sbr.rel (%p2454) target = $region48
        $region47: #{tpu_custom_call.1} parent=43 // pred_region
          %s2457 = sand.u32 %s78, 1
          %s2458 = scalar_lea.sflag [#allocation5], %s2457
          %s2459 = sand.u32 %s78, 1
          %s2460 = smul.addr %s2459, 64
          %s2461 = scalar_lea.vmem [#allocation6], %s2460
          %2462 = dma.done %s2458, 1024
        $region48: #{tpu_custom_call.1} parent=43 // pred_fallthru
          _
      $region44: #{tpu_custom_call.1} parent=5 // pred_fallthru
        _
    $region6: #{tpu_custom_call.1} parent=1 // loop_footer
      %s17 = sadd.s32 1, %s13
    $region7: #{tpu_custom_call.1} parent=1 // loop_footer_branch
      %12 = sbr.rel target = $region3
    $region8: #{tpu_custom_call.1} parent=1 // loop_exit
      _
    %2463 = vsyncpa [#allocation4], 1
    %s2464 = scalar_lea.sflag [#allocation4], 1
    %2465 = vsyncpa %s2464, 1
    %2466 = vsyncpa [#allocation5], 1
    %s2467 = scalar_lea.sflag [#allocation5], 1
    %2468 = vsyncpa %s2467, 1

</llo_original>
